<compile_context>
chip_gen: v7x
topology: tpu7x:2x2x1
jax: 0.10.0
libtpu: 0.0.40
codegen_flags: <defaults>
</compile_context>

<pallas_src>
import functools
import math

import jax
import jax.numpy as jnp
from jax.experimental import pallas as pl
from jax.experimental.pallas import tpu as pltpu


def _round_up(n, m):
    return ((n + m - 1) // m) * m


def _tpu_vmem_capacity():
    try:
        return int(pltpu.get_tpu_info().vmem_capacity_bytes)
    except Exception:
        return 64 * 1024 * 1024  # conservative (v7x per-TC) fallback


def _choose_blocks(B, S, Dp, budget):
    """Pick (TB, TS): batch tile (multiple of 8) and sequence chunk, VMEM-budget aware."""

    def ru8(n):
        return _round_up(n, 8)

    def step_bytes(tb, ts):
        ts8 = ru8(ts)
        x_blk = 2 * tb * ts8 * Dp * 2                     # bf16 x, double-buffered
        bias_blk = 2 * tb * 8 * _round_up(ts, 128) * 4    # (tb,1,ts) pads to 8 sublanes
        w1 = 2 * Dp * Dp * 2                              # bf16 W1, double-buffered
        prm = 2 * 8 * Dp * 4                              # packed params
        out_blk = 2 * tb * 8 * Dp * 4                     # (tb,1,Dp) output block
        scr = tb * 8 * Dp * 4 + 2 * tb * 8 * 128 * 4      # acc + m/l scratch
        temps = 5 * tb * ts8 * Dp * 4                     # f32 h / hn / hg / exp temporaries
        return x_blk + bias_blk + w1 + prm + out_blk + scr + temps

    B8 = ru8(max(B, 1))

    # Sequence chunk: whole sequence in one block when it fits at the minimum batch tile,
    # otherwise chunk in multiples of 128 (flash-style online softmax handles the rest).
    ts = S
    if step_bytes(8, S) > budget and S > 128:
        ts = 1024
        while ts > 128 and step_bytes(8, ts) > budget:
            ts //= 2
        ts = min(ts, _round_up(S, 128))

    # Batch tile: multiple of 8, target >= 512 MXU rows per step, then grow while the VMEM
    # budget allows (bounded so the f32 activation temporaries stay in check).
    tb = min(ru8(max(1, -(-512 // ts))), B8)
    while tb > 8 and step_bytes(tb, ts) > budget:
        tb -= 8
    while tb + 8 <= B8 and (tb + 8) * ts <= 4096 and step_bytes(tb + 8, ts) <= budget:
        tb += 8

    # v7x has two TensorCores: keep >= 2 batch blocks when the batch allows it so the
    # "parallel" batch grid axis can be split across cores.
    if tb >= B8 and B8 >= 16:
        tb = max(8, (B8 // 2) // 8 * 8)

    return tb, ts, step_bytes(tb, ts)


def _attn_pool_kernel(x_ref, bias_ref, w1_ref, p_ref, out_ref,
                      m_sc, l_sc, acc_sc, *, d_true):
    """Grid = (batch blocks, sequence chunks). x_ref: (TB, TS, Dp) bf16; bias_ref: (TB,1,TS)
    f32; w1_ref: (Dp, Dp) bf16; p_ref: (4, Dp) f32 rows = [b1, gamma, beta, w2]."""
    si = pl.program_id(1)
    TB, TS, Dp = x_ref.shape

    @pl.when(si == 0)
    def _init():
        m_sc[...] = jnp.full(m_sc.shape, -jnp.inf, dtype=m_sc.dtype)
        l_sc[...] = jnp.zeros(l_sc.shape, dtype=l_sc.dtype)
        acc_sc[...] = jnp.zeros(acc_sc.shape, dtype=acc_sc.dtype)

    x = x_ref[...]                                   # (TB, TS, Dp) bf16
    x2 = x.reshape(TB * TS, Dp)                      # leading-dim merge (layout-free)

    # ---- Linear(D, D): bf16 operands, f32 accumulation on the MXU ----
    h = jnp.dot(x2, w1_ref[...], preferred_element_type=jnp.float32)
    h = h + p_ref[0:1, :]                            # + b1 (padded cols stay exactly 0)

    # ---- LayerNorm(D), eps = 1e-5, fused single-pass stats, true-D divisor ----
    inv_d = 1.0 / d_true
    mu = jnp.sum(h, axis=-1, keepdims=True) * inv_d
    var = jnp.maximum(jnp.sum(h * h, axis=-1, keepdims=True) * inv_d - mu * mu, 0.0)
    hn = (h - mu) * jax.lax.rsqrt(var + 1e-5) * p_ref[1:2, :] + p_ref[2:3, :]

    # ---- GELU (exact erf form, matching nn.GELU default) ----
    hg = 0.5 * hn * (1.0 + jax.lax.erf(hn * (1.0 / math.sqrt(2.0))))

    # ---- Linear(D, 1) as a q=1 batched contraction -> scores lane-dense over TS ----
    hg3 = hg.reshape(TB, TS, Dp)
    w2q = jnp.broadcast_to(p_ref[3:4, :].reshape(1, 1, Dp), (TB, 1, Dp))
    s = jnp.einsum('bqd,bkd->bqk', w2q, hg3,
                   preferred_element_type=jnp.float32)          # (TB, 1, TS)
    s = s + bias_ref[...]                                       # mask bias (+ b2 folded in)

    # ---- online (flash-style) softmax over the sequence axis ----
    m_prev = m_sc[...]
    m_new = jnp.maximum(m_prev, jnp.max(s, axis=-1, keepdims=True))
    alpha = jnp.exp(m_prev - m_new)
    p = jnp.exp(s - m_new)                                      # (TB, 1, TS)
    l_sc[...] = alpha * l_sc[...] + jnp.sum(p, axis=-1, keepdims=True)
    m_sc[...] = m_new

    # ---- weighted sum of hidden states on the MXU: (TB,1,TS) x (TB,TS,Dp) -> (TB,1,Dp) ----
    pv = jnp.einsum('bqk,bkd->bqd', p.astype(jnp.bfloat16), x,
                    preferred_element_type=jnp.float32)
    acc_sc[...] = alpha * acc_sc[...] + pv

    @pl.when(si == pl.num_programs(1) - 1)
    def _finalize():
        out_ref[...] = (acc_sc[...] *
                        pl.reciprocal(l_sc[...], approx=True)).astype(out_ref.dtype)


@jax.jit
def attention_pooling(last_hidden_state, attention_mask, params):
    """params = (W1, b1, gamma, beta, W2, b2). W1 is (D, D) laid out for h = x @ W1
    (torch Linear weight transposed); W2 is (D, 1)."""
    W1, b1, gamma, beta, W2, b2 = params
    B, S, D = last_hidden_state.shape

    Dp = _round_up(D, 128)
    cap = _tpu_vmem_capacity()
    budget = min(48 * 1024 * 1024, int(cap * 0.7))
    TB, TS, est = _choose_blocks(B, S, Dp, budget)
    S_pad = S if TS == S else _round_up(S, TS)
    B_pad = _round_up(_round_up(B, 8), TB)
    grid = (B_pad // TB, S_pad // TS)

    # x: bf16 MXU operand (halves DMA); zero-pad batch / seq / feature to the block grid.
    x = last_hidden_state.astype(jnp.bfloat16)
    x = jnp.pad(x, ((0, B_pad - B), (0, S_pad - S), (0, Dp - D)))

    # Compact additive mask bias (0 valid / -1e30 masked) with b2 folded in (exact under
    # softmax shift-invariance). Padded positions/rows are masked too.
    bias = jnp.where(attention_mask == 0, jnp.float32(-1e30), jnp.float32(0.0))
    bias = bias + b2.astype(jnp.float32).reshape(())
    bias = jnp.pad(bias, ((0, B_pad - B), (0, S_pad - S)), constant_values=-1e30)
    bias = bias.reshape(B_pad, 1, S_pad)

    # Weights: W1 zero-padded to (Dp, Dp) bf16; b1/gamma/beta/w2 packed into one (4, Dp).
    w1p = jnp.pad(W1.astype(jnp.bfloat16), ((0, Dp - D), (0, Dp - D)))

    def pad_row(v):
        return jnp.pad(v.reshape(-1).astype(jnp.float32), (0, Dp - D))

    packed = jnp.stack([pad_row(b1), pad_row(gamma), pad_row(beta), pad_row(W2)], axis=0)

    # Scheduler / VMEM hints.
    flops = int(2 * B_pad * S_pad * Dp * Dp + 14 * B_pad * S_pad * Dp)
    transcendentals = int(2 * B_pad * S_pad + B_pad)
    bytes_accessed = int(B_pad * S_pad * Dp * 2 + B_pad * S_pad * 4
                         + Dp * Dp * 2 + 4 * Dp * 4 + B_pad * Dp * 4)
    vmem_limit = int(min(int(cap * 0.85), max(budget, est) + 16 * 1024 * 1024))

    # NOTE: W1's block index is constant across the grid; single-buffering it
    # (pipeline_mode) would free Dp*Dp*2 bytes more on v7x once verified on this JAX rev.
    kernel = functools.partial(_attn_pool_kernel, d_true=D)
    out = pl.pallas_call(
        kernel,
        out_shape=jax.ShapeDtypeStruct((B_pad, 1, Dp), jnp.float32),
        grid_spec=pltpu.PrefetchScalarGridSpec(
            num_scalar_prefetch=0,
            grid=grid,
            in_specs=[
                pl.BlockSpec((TB, TS, Dp), lambda i, j: (i, j, 0)),  # x (bf16)
                pl.BlockSpec((TB, 1, TS), lambda i, j: (i, 0, j)),   # additive mask bias
                pl.BlockSpec((Dp, Dp), lambda i, j: (0, 0)),         # W1 (bf16, x @ W1)
                pl.BlockSpec((4, Dp), lambda i, j: (0, 0)),          # [b1; gamma; beta; w2]
            ],
            out_specs=pl.BlockSpec((TB, 1, Dp), lambda i, j: (i, 0, 0)),
            scratch_shapes=[
                pltpu.VMEM((TB, 1, 1), jnp.float32),    # running max
                pltpu.VMEM((TB, 1, 1), jnp.float32),    # running softmax denominator
                pltpu.VMEM((TB, 1, Dp), jnp.float32),   # running weighted sum
            ]),
        compiler_params=pltpu.CompilerParams(
            dimension_semantics=("parallel", "arbitrary"),
            vmem_limit_bytes=vmem_limit),
        cost_estimate=pl.CostEstimate(flops=flops,
                                      transcendentals=transcendentals,
                                      bytes_accessed=bytes_accessed),
    )(x, bias, w1p, packed)

    return out.reshape(B_pad, Dp)[:B, :D]


def _reference(last_hidden_state, attention_mask, params):
    """Pure-JAX f32 reference mirroring the PyTorch forward."""
    W1, b1, gamma, beta, W2, b2 = params
    x = last_hidden_state.astype(jnp.float32)
    h = x @ W1 + b1
    mu = jnp.mean(h, axis=-1, keepdims=True)
    var = jnp.mean((h - mu) ** 2, axis=-1, keepdims=True)
    hn = (h - mu) / jnp.sqrt(var + 1e-5) * gamma + beta
    hg = 0.5 * hn * (1.0 + jax.lax.erf(hn / jnp.sqrt(2.0)))
    w = hg @ W2 + b2                                   # (B, S, 1)
    w = jnp.where(attention_mask[..., None] == 0, -jnp.inf, w)
    w = jax.nn.softmax(w, axis=1)
    return jnp.sum(w * x, axis=1)


if __name__ == "__main__":
    key = jax.random.PRNGKey(0)
    B, S, D = 2, 8, 32  # batch, seq, in_dim

    k_x, k_w1, k_b1, k_w2, k_b2 = jax.random.split(key, 5)

    last_hidden_state = jax.random.normal(k_x, (B, S, D), dtype=jnp.float32)
    attention_mask = jnp.array(
        [[1, 1, 1, 1, 1, 1, 0, 0],
         [1, 1, 1, 1, 0, 0, 0, 0]], dtype=jnp.int32)

    # Parameter shapes match nn.Linear(D, D), nn.LayerNorm(D), nn.Linear(D, 1).
    W1 = jax.random.normal(k_w1, (D, D), dtype=jnp.float32) * (1.0 / math.sqrt(D))
    b1 = jax.random.normal(k_b1, (D,), dtype=jnp.float32) * 0.01
    gamma = jnp.ones((D,), dtype=jnp.float32)
    beta = jnp.zeros((D,), dtype=jnp.float32)
    W2 = jax.random.normal(k_w2, (D, 1), dtype=jnp.float32) * (1.0 / math.sqrt(D))
    b2 = jax.random.normal(k_b2, (1,), dtype=jnp.float32) * 0.01
    params = (W1, b1, gamma, beta, W2, b2)

    out = attention_pooling(last_hidden_state, attention_mask, params)
    out = jax.block_until_ready(out)

    ref = _reference(last_hidden_state, attention_mask, params)
    assert out.shape == (B, D)
    # Tolerance accounts for bf16 MXU operands (x, W1, softmax weights) with f32 accumulation.
    assert jnp.allclose(out, ref, atol=3e-2, rtol=3e-2), "mismatch vs reference"

    print("KERNEL_OK")
</pallas_src>

<mosaic_0001>
module attributes {stable_mosaic.version = 11 : i64} {
  func.func @_attn_pool_kernel(%arg0: i32, %arg1: i32, %arg2: memref<8x8x128xbf16, #tpu.memory_space<vmem>>, %arg3: memref<8x1x8xf32, #tpu.memory_space<vmem>>, %arg4: memref<128x128xbf16, #tpu.memory_space<vmem>>, %arg5: memref<4x128xf32, #tpu.memory_space<vmem>>, %arg6: memref<8x1x128xf32, #tpu.memory_space<vmem>>, %arg7: memref<8x1x1xf32, #tpu.memory_space<vmem>>, %arg8: memref<8x1x1xf32, #tpu.memory_space<vmem>>, %arg9: memref<8x1x128xf32, #tpu.memory_space<vmem>>) attributes {dimension_semantics = [#tpu.dimension_semantics<parallel>, #tpu.dimension_semantics<arbitrary>], iteration_bounds = array<i64: 1, 1>, scalar_prefetch = 0 : i64, scratch_operands = 3 : i64, tpu.core_type = #tpu.core_type<tc>, window_params = [{transform_indices = @transform_0, window_bounds = array<i64: 8, 8, 128>}, {transform_indices = @transform_1, window_bounds = array<i64: 8, 1, 8>}, {pipeline_mode = #tpu.pipeline_mode<synchronous>, transform_indices = @transform_2, window_bounds = array<i64: 128, 128>}, {pipeline_mode = #tpu.pipeline_mode<synchronous>, transform_indices = @transform_3, window_bounds = array<i64: 4, 128>}, {transform_indices = @transform_4, window_bounds = array<i64: 8, 1, 128>}]} {
    %c0_i32 = arith.constant 0 : i32
    %0 = arith.cmpi eq, %arg1, %c0_i32 : i32
    %1 = arith.extui %0 : i1 to i32
    %c0_i32_0 = arith.constant 0 : i32
    %2 = arith.cmpi ne, %1, %c0_i32_0 : i32
    scf.if %2 {
      %cst_46 = arith.constant 0xFF800000 : f32
      %78 = vector.broadcast %cst_46 : f32 to vector<8x1x1xf32>
      %c0_47 = arith.constant 0 : index
      %c0_48 = arith.constant 0 : index
      %c0_49 = arith.constant 0 : index
      %79 = vector.load %arg7[%c0_47, %c0_48, %c0_49] : memref<8x1x1xf32, #tpu.memory_space<vmem>>, vector<8x1x1xf32>
      tpu.vector_store %arg7[%c0_47, %c0_48, %c0_49], %78 {strides = array<i32>} : memref<8x1x1xf32, #tpu.memory_space<vmem>>, vector<8x1x1xf32>,
      %cst_50 = arith.constant 0.000000e+00 : f32
      %80 = vector.broadcast %cst_50 : f32 to vector<8x1x1xf32>
      %c0_51 = arith.constant 0 : index
      %c0_52 = arith.constant 0 : index
      %c0_53 = arith.constant 0 : index
      %81 = vector.load %arg8[%c0_51, %c0_52, %c0_53] : memref<8x1x1xf32, #tpu.memory_space<vmem>>, vector<8x1x1xf32>
      tpu.vector_store %arg8[%c0_51, %c0_52, %c0_53], %80 {strides = array<i32>} : memref<8x1x1xf32, #tpu.memory_space<vmem>>, vector<8x1x1xf32>,
      %cst_54 = arith.constant 0.000000e+00 : f32
      %82 = vector.broadcast %cst_54 : f32 to vector<8x1x128xf32>
      %c0_55 = arith.constant 0 : index
      %c0_56 = arith.constant 0 : index
      %c0_57 = arith.constant 0 : index
      %83 = vector.load %arg9[%c0_55, %c0_56, %c0_57] : memref<8x1x128xf32, #tpu.memory_space<vmem>>, vector<8x1x128xf32>
      tpu.vector_store %arg9[%c0_55, %c0_56, %c0_57], %82 {strides = array<i32>} : memref<8x1x128xf32, #tpu.memory_space<vmem>>, vector<8x1x128xf32>,
    } else {
    }
    %c0 = arith.constant 0 : index
    %c0_1 = arith.constant 0 : index
    %c0_2 = arith.constant 0 : index
    %3 = vector.load %arg2[%c0, %c0_1, %c0_2] : memref<8x8x128xbf16, #tpu.memory_space<vmem>>, vector<8x8x128xbf16>
    %4 = vector.shape_cast %3 : vector<8x8x128xbf16> to vector<64x128xbf16>
    %c0_3 = arith.constant 0 : index
    %c0_4 = arith.constant 0 : index
    %5 = vector.load %arg4[%c0_3, %c0_4] : memref<128x128xbf16, #tpu.memory_space<vmem>>, vector<128x128xbf16>
    %cst = arith.constant dense<0.000000e+00> : vector<64x128xf32>
    %6 = tpu.matmul %4, %5, %cst {dimension_numbers = #tpu.dot_dimension_numbers<[1], [0], [0], [1], [0, 0, 1, 1], [], []>} : vector<64x128xbf16>, vector<128x128xbf16>, vector<64x128xf32> -> vector<64x128xf32>
    %c0_5 = arith.constant 0 : index
    %c0_6 = arith.constant 0 : index
    %7 = vector.load %arg5[%c0_5, %c0_6] : memref<4x128xf32, #tpu.memory_space<vmem>>, vector<1x128xf32>
    %8 = vector.broadcast %7 : vector<1x128xf32> to vector<64x128xf32>
    %9 = arith.addf %6, %8 : vector<64x128xf32>
    %cst_7 = arith.constant dense<0.000000e+00> : vector<64xf32>
    %10 = vector.multi_reduction <add>, %9, %cst_7 [1] : vector<64x128xf32> to vector<64xf32>
    %11 = vector.shape_cast %10 : vector<64xf32> to vector<64x1xf32>
    %cst_8 = arith.constant 3.125000e-02 : f32
    %12 = vector.broadcast %cst_8 : f32 to vector<64x1xf32>
    %13 = arith.mulf %11, %12 : vector<64x1xf32>
    %14 = arith.mulf %9, %9 : vector<64x128xf32>
    %cst_9 = arith.constant dense<0.000000e+00> : vector<64xf32>
    %15 = vector.multi_reduction <add>, %14, %cst_9 [1] : vector<64x128xf32> to vector<64xf32>
    %16 = vector.shape_cast %15 : vector<64xf32> to vector<64x1xf32>
    %cst_10 = arith.constant 3.125000e-02 : f32
    %17 = vector.broadcast %cst_10 : f32 to vector<64x1xf32>
    %18 = arith.mulf %16, %17 : vector<64x1xf32>
    %19 = arith.mulf %13, %13 : vector<64x1xf32>
    %20 = arith.subf %18, %19 : vector<64x1xf32>
    %cst_11 = arith.constant 0.000000e+00 : f32
    %21 = vector.broadcast %cst_11 : f32 to vector<64x1xf32>
    %22 = arith.maximumf %20, %21 : vector<64x1xf32>
    %23 = vector.broadcast %13 : vector<64x1xf32> to vector<64x128xf32>
    %24 = arith.subf %9, %23 : vector<64x128xf32>
    %cst_12 = arith.constant 9.99999974E-6 : f32
    %25 = vector.broadcast %cst_12 : f32 to vector<64x1xf32>
    %26 = arith.addf %22, %25 : vector<64x1xf32>
    %27 = math.rsqrt %26 : vector<64x1xf32>
    %28 = vector.broadcast %27 : vector<64x1xf32> to vector<64x128xf32>
    %29 = arith.mulf %24, %28 : vector<64x128xf32>
    %c1 = arith.constant 1 : index
    %c0_13 = arith.constant 0 : index
    %30 = vector.load %arg5[%c1, %c0_13] : memref<4x128xf32, #tpu.memory_space<vmem>>, vector<1x128xf32>
    %31 = vector.broadcast %30 : vector<1x128xf32> to vector<64x128xf32>
    %32 = arith.mulf %29, %31 : vector<64x128xf32>
    %c2 = arith.constant 2 : index
    %c0_14 = arith.constant 0 : index
    %33 = vector.load %arg5[%c2, %c0_14] : memref<4x128xf32, #tpu.memory_space<vmem>>, vector<1x128xf32>
    %34 = vector.broadcast %33 : vector<1x128xf32> to vector<64x128xf32>
    %35 = arith.addf %32, %34 : vector<64x128xf32>
    %cst_15 = arith.constant 5.000000e-01 : f32
    %36 = vector.broadcast %cst_15 : f32 to vector<64x128xf32>
    %37 = arith.mulf %36, %35 : vector<64x128xf32>
    %cst_16 = arith.constant 0.707106769 : f32
    %38 = vector.broadcast %cst_16 : f32 to vector<64x128xf32>
    %39 = arith.mulf %35, %38 : vector<64x128xf32>
    %40 = math.erf %39 : vector<64x128xf32>
    %cst_17 = arith.constant 1.000000e+00 : f32
    %41 = vector.broadcast %cst_17 : f32 to vector<64x128xf32>
    %42 = arith.addf %41, %40 : vector<64x128xf32>
    %43 = arith.mulf %37, %42 : vector<64x128xf32>
    %44 = vector.shape_cast %43 : vector<64x128xf32> to vector<8x8x128xf32>
    %c3 = arith.constant 3 : index
    %c0_18 = arith.constant 0 : index
    %45 = vector.load %arg5[%c3, %c0_18] : memref<4x128xf32, #tpu.memory_space<vmem>>, vector<1x128xf32>
    %46 = vector.shape_cast %45 : vector<1x128xf32> to vector<1x1x128xf32>
    %47 = vector.shape_cast %46 : vector<1x1x128xf32> to vector<1x1x128xf32>
    %48 = vector.broadcast %47 : vector<1x1x128xf32> to vector<8x1x128xf32>
    "tpu.trace_start"() <{level = 10 : i32, message = "bqd,bkd->bqk"}> : () -> ()
    %cst_19 = arith.constant dense<0.000000e+00> : vector<8x1x8xf32>
    %49 = tpu.matmul %48, %44, %cst_19 {dimension_numbers = #tpu.dot_dimension_numbers<[2], [2], [1], [1], [0, 0, 0, 1, 1, 1], [0], [0]>} : vector<8x1x128xf32>, vector<8x8x128xf32>, vector<8x1x8xf32> -> vector<8x1x8xf32>
    "tpu.trace_stop"() : () -> ()
    %c0_20 = arith.constant 0 : index
    %c0_21 = arith.constant 0 : index
    %c0_22 = arith.constant 0 : index
    %50 = vector.load %arg3[%c0_20, %c0_21, %c0_22] : memref<8x1x8xf32, #tpu.memory_space<vmem>>, vector<8x1x8xf32>
    %51 = arith.addf %49, %50 : vector<8x1x8xf32>
    %c0_23 = arith.constant 0 : index
    %c0_24 = arith.constant 0 : index
    %c0_25 = arith.constant 0 : index
    %52 = vector.load %arg7[%c0_23, %c0_24, %c0_25] : memref<8x1x1xf32, #tpu.memory_space<vmem>>, vector<8x1x1xf32>
    %cst_26 = arith.constant dense<0xFF800000> : vector<8x1xf32>
    %53 = vector.multi_reduction <maximumf>, %51, %cst_26 [2] : vector<8x1x8xf32> to vector<8x1xf32>
    %54 = vector.shape_cast %53 : vector<8x1xf32> to vector<8x1x1xf32>
    %55 = arith.maximumf %52, %54 : vector<8x1x1xf32>
    %56 = arith.subf %52, %55 : vector<8x1x1xf32>
    %57 = math.exp %56 : vector<8x1x1xf32>
    %58 = vector.broadcast %55 : vector<8x1x1xf32> to vector<8x1x8xf32>
    %59 = arith.subf %51, %58 : vector<8x1x8xf32>
    %60 = math.exp %59 : vector<8x1x8xf32>
    %c0_27 = arith.constant 0 : index
    %c0_28 = arith.constant 0 : index
    %c0_29 = arith.constant 0 : index
    %61 = vector.load %arg8[%c0_27, %c0_28, %c0_29] : memref<8x1x1xf32, #tpu.memory_space<vmem>>, vector<8x1x1xf32>
    %62 = arith.mulf %57, %61 : vector<8x1x1xf32>
    %cst_30 = arith.constant dense<0.000000e+00> : vector<8x1xf32>
    %63 = vector.multi_reduction <add>, %60, %cst_30 [2] : vector<8x1x8xf32> to vector<8x1xf32>
    %64 = vector.shape_cast %63 : vector<8x1xf32> to vector<8x1x1xf32>
    %65 = arith.addf %62, %64 : vector<8x1x1xf32>
    %c0_31 = arith.constant 0 : index
    %c0_32 = arith.constant 0 : index
    %c0_33 = arith.constant 0 : index
    %66 = vector.load %arg8[%c0_31, %c0_32, %c0_33] : memref<8x1x1xf32, #tpu.memory_space<vmem>>, vector<8x1x1xf32>
    tpu.vector_store %arg8[%c0_31, %c0_32, %c0_33], %65 {strides = array<i32>} : memref<8x1x1xf32, #tpu.memory_space<vmem>>, vector<8x1x1xf32>,
    %c0_34 = arith.constant 0 : index
    %c0_35 = arith.constant 0 : index
    %c0_36 = arith.constant 0 : index
    %67 = vector.load %arg7[%c0_34, %c0_35, %c0_36] : memref<8x1x1xf32, #tpu.memory_space<vmem>>, vector<8x1x1xf32>
    tpu.vector_store %arg7[%c0_34, %c0_35, %c0_36], %55 {strides = array<i32>} : memref<8x1x1xf32, #tpu.memory_space<vmem>>, vector<8x1x1xf32>,
    %68 = arith.truncf %60 : vector<8x1x8xf32> to vector<8x1x8xbf16>
    "tpu.trace_start"() <{level = 10 : i32, message = "bqk,bkd->bqd"}> : () -> ()
    %cst_37 = arith.constant dense<0.000000e+00> : vector<8x1x128xf32>
    %69 = tpu.matmul %68, %3, %cst_37 {dimension_numbers = #tpu.dot_dimension_numbers<[2], [1], [1], [2], [0, 0, 0, 1, 1, 2], [0], [0]>} : vector<8x1x8xbf16>, vector<8x8x128xbf16>, vector<8x1x128xf32> -> vector<8x1x128xf32>
    "tpu.trace_stop"() : () -> ()
    %c0_38 = arith.constant 0 : index
    %c0_39 = arith.constant 0 : index
    %c0_40 = arith.constant 0 : index
    %70 = vector.load %arg9[%c0_38, %c0_39, %c0_40] : memref<8x1x128xf32, #tpu.memory_space<vmem>>, vector<8x1x128xf32>
    %71 = vector.broadcast %57 : vector<8x1x1xf32> to vector<8x1x128xf32>
    %72 = arith.mulf %71, %70 : vector<8x1x128xf32>
    %73 = arith.addf %72, %69 : vector<8x1x128xf32>
    %c0_41 = arith.constant 0 : index
    %c0_42 = arith.constant 0 : index
    %c0_43 = arith.constant 0 : index
    %74 = vector.load %arg9[%c0_41, %c0_42, %c0_43] : memref<8x1x128xf32, #tpu.memory_space<vmem>>, vector<8x1x128xf32>
    tpu.vector_store %arg9[%c0_41, %c0_42, %c0_43], %73 {strides = array<i32>} : memref<8x1x128xf32, #tpu.memory_space<vmem>>, vector<8x1x128xf32>,
    %c0_i32_44 = arith.constant 0 : i32
    %75 = arith.cmpi eq, %arg1, %c0_i32_44 : i32
    %76 = arith.extui %75 : i1 to i32
    %c0_i32_45 = arith.constant 0 : i32
    %77 = arith.cmpi ne, %76, %c0_i32_45 : i32
    scf.if %77 {
      %c0_46 = arith.constant 0 : index
      %c0_47 = arith.constant 0 : index
      %c0_48 = arith.constant 0 : index
      %78 = vector.load %arg9[%c0_46, %c0_47, %c0_48] : memref<8x1x128xf32, #tpu.memory_space<vmem>>, vector<8x1x128xf32>
      %c0_49 = arith.constant 0 : index
      %c0_50 = arith.constant 0 : index
      %c0_51 = arith.constant 0 : index
      %79 = vector.load %arg8[%c0_49, %c0_50, %c0_51] : memref<8x1x1xf32, #tpu.memory_space<vmem>>, vector<8x1x1xf32>
      %80 = tpu.reciprocal %79 {approx = true} : vector<8x1x1xf32> -> vector<8x1x1xf32>
      %81 = vector.broadcast %80 : vector<8x1x1xf32> to vector<8x1x128xf32>
      %82 = arith.mulf %78, %81 : vector<8x1x128xf32>
      %c0_52 = arith.constant 0 : index
      %c0_53 = arith.constant 0 : index
      %c0_54 = arith.constant 0 : index
      %83 = vector.load %arg6[%c0_52, %c0_53, %c0_54] : memref<8x1x128xf32, #tpu.memory_space<vmem>>, vector<8x1x128xf32>
      tpu.vector_store %arg6[%c0_52, %c0_53, %c0_54], %82 {strides = array<i32>} : memref<8x1x128xf32, #tpu.memory_space<vmem>>, vector<8x1x128xf32>,
    } else {
    }
    return
  }
  func.func @transform_0(%arg0: i32, %arg1: i32) -> (i32, i32, i32) {
    %c0_i32 = arith.constant 0 : i32
    %c0_i32_0 = arith.constant 0 : i32
    return %arg0, %arg1, %c0_i32 : i32, i32, i32
  }
  func.func @transform_1(%arg0: i32, %arg1: i32) -> (i32, i32, i32) {
    %c0_i32 = arith.constant 0 : i32
    %c0_i32_0 = arith.constant 0 : i32
    return %arg0, %c0_i32, %arg1 : i32, i32, i32
  }
  func.func @transform_2(%arg0: i32, %arg1: i32) -> (i32, i32) {
    %c0_i32 = arith.constant 0 : i32
    %c0_i32_0 = arith.constant 0 : i32
    %c0_i32_1 = arith.constant 0 : i32
    return %c0_i32, %c0_i32_0 : i32, i32
  }
  func.func @transform_3(%arg0: i32, %arg1: i32) -> (i32, i32) {
    %c0_i32 = arith.constant 0 : i32
    %c0_i32_0 = arith.constant 0 : i32
    %c0_i32_1 = arith.constant 0 : i32
    return %c0_i32, %c0_i32_0 : i32, i32
  }
  func.func @transform_4(%arg0: i32, %arg1: i32) -> (i32, i32, i32) {
    %c0_i32 = arith.constant 0 : i32
    %c0_i32_0 = arith.constant 0 : i32
    %c0_i32_1 = arith.constant 0 : i32
    return %arg0, %c0_i32, %c0_i32_0 : i32, i32, i32
  }
}

</mosaic_0001>

<llo_original>
// kernel: attention_pooling.1
$region0: #{attention_pooling.1}
  #allocation0 [shape = 'u32[]', space=smem, size = 0x4, offset = 0x4, fixed_abs, tag = 'smem constant byte address 0x4 - core index']
  #allocation1 [shape = 'u32[144,128]{1,0:T(1,128)}', space=vmem, size = 0x12000, scoped, tag = 'internal scratch']
  #allocation2 [shape = 'f32[8,1,1]{2,1,0:T(1,128)}', space=vmem, size = 0x1000, scoped, tag = 'scratch operand']
  #allocation3 [shape = 'f32[8,1,1]{2,1,0:T(1,128)}', space=vmem, size = 0x1000, scoped, tag = 'scratch operand']
  #allocation4 [shape = 'f32[8,1,128]{2,1,0:T(1,128)}', space=vmem, size = 0x1000, scoped, tag = 'scratch operand']
  %s0 = inlined_call_operand.vmem [shape: bf16[8,8,128], index: 0, kind: input, shape index: {}]
  %s1 = inlined_call_operand.vmem [shape: f32[8,1,8], index: 1, kind: input, shape index: {}]
  %s2 = inlined_call_operand.vmem [shape: bf16[128,128], index: 2, kind: input, shape index: {}]
  %s3 = inlined_call_operand.vmem [shape: f32[4,128], index: 3, kind: input, shape index: {}]
  %s4 = inlined_call_operand.vmem [shape: f32[8,1,128], index: 4, kind: output, shape index: {}]
  %s5 = sld [smem:[#allocation0]]
  $region34: #{attention_pooling.1} parent=0
    _
  %s7 = ssub.s32 1, %s5
  %s8 = scalar_select 0, %s7, %s5
  // Predicated region
  $region2: #{attention_pooling.1} parent=0 // pred_check
    _
  $region3: #{attention_pooling.1} parent=0 // pred_check_branch
    %10 = sbr.rel (0) target = $region5
  $region4: #{attention_pooling.1} parent=0 // pred_region
    _
  $region5: #{attention_pooling.1} parent=0 // pred_fallthru
    _
  // Predicated region
  $region6: #{attention_pooling.1} parent=0 // pred_check
    _
  $region7: #{attention_pooling.1} parent=0 // pred_check_branch
    %12 = sbr.rel (0) target = $region9
  $region8: #{attention_pooling.1} parent=0 // pred_region
    _
  $region9: #{attention_pooling.1} parent=0 // pred_fallthru
    _
  // Predicated region
  $region10: #{attention_pooling.1} parent=0 // pred_check
    _
  $region11: #{attention_pooling.1} parent=0 // pred_check_branch
    %14 = sbr.rel (0) target = $region13
  $region12: #{attention_pooling.1} parent=0 // pred_region
    _
  $region13: #{attention_pooling.1} parent=0 // pred_fallthru
    _
  // Predicated region
  $region14: #{attention_pooling.1} parent=0 // pred_check
    _
  $region15: #{attention_pooling.1} parent=0 // pred_check_branch
    %16 = sbr.rel (0) target = $region17
  $region16: #{attention_pooling.1} parent=0 // pred_region
    _
  $region17: #{attention_pooling.1} parent=0 // pred_fallthru
    _
  %p18 = scmp.eq.s32.totalorder 0, 0
  // Predicated region
  $region18: #{attention_pooling.1} parent=0 // pred_check
    %p19 = pneg %p18
  $region19: #{attention_pooling.1} parent=0 // pred_check_branch
    %21 = sbr.rel (%p19) target = $region21
  $region20: #{attention_pooling.1} parent=0 // pred_region
    %vm22 = vcmask 0
    %23 = vst.msk [vmem:[#allocation2] sm:$0x1] %vm22, -inf
    %24 = vst.msk [vmem:[#allocation2 + $0x1] sm:$0x1] %vm22, -inf
    %25 = vst.msk [vmem:[#allocation2 + $0x2] sm:$0x1] %vm22, -inf
    %26 = vst.msk [vmem:[#allocation2 + $0x3] sm:$0x1] %vm22, -inf
    %27 = vst.msk [vmem:[#allocation2 + $0x4] sm:$0x1] %vm22, -inf
    %28 = vst.msk [vmem:[#allocation2 + $0x5] sm:$0x1] %vm22, -inf
    %29 = vst.msk [vmem:[#allocation2 + $0x6] sm:$0x1] %vm22, -inf
    %30 = vst.msk [vmem:[#allocation2 + $0x7] sm:$0x1] %vm22, -inf
    %31 = vst.msk [vmem:[#allocation3] sm:$0x1] %vm22, 0.0
    %32 = vst.msk [vmem:[#allocation3 + $0x1] sm:$0x1] %vm22, 0.0
    %33 = vst.msk [vmem:[#allocation3 + $0x2] sm:$0x1] %vm22, 0.0
    %34 = vst.msk [vmem:[#allocation3 + $0x3] sm:$0x1] %vm22, 0.0
    %35 = vst.msk [vmem:[#allocation3 + $0x4] sm:$0x1] %vm22, 0.0
    %36 = vst.msk [vmem:[#allocation3 + $0x5] sm:$0x1] %vm22, 0.0
    %37 = vst.msk [vmem:[#allocation3 + $0x6] sm:$0x1] %vm22, 0.0
    %38 = vst.msk [vmem:[#allocation3 + $0x7] sm:$0x1] %vm22, 0.0
    %39 = vst [vmem:[#allocation4] sm:$0x1] 0.0
    %40 = vst [vmem:[#allocation4 + $0x1] sm:$0x1] 0.0
    %41 = vst [vmem:[#allocation4 + $0x2] sm:$0x1] 0.0
    %42 = vst [vmem:[#allocation4 + $0x3] sm:$0x1] 0.0
    %43 = vst [vmem:[#allocation4 + $0x4] sm:$0x1] 0.0
    %44 = vst [vmem:[#allocation4 + $0x5] sm:$0x1] 0.0
    %45 = vst [vmem:[#allocation4 + $0x6] sm:$0x1] 0.0
    %46 = vst [vmem:[#allocation4 + $0x7] sm:$0x1] 0.0
  $region21: #{attention_pooling.1} parent=0 // pred_fallthru
    _
  %v47 = vld [vmem:[%s0] sm:$0xf]
  %v48 = vld [vmem:[%s0 + $0x4] sm:$0xf]
  %v49 = vld [vmem:[%s0 + $0x8] sm:$0xf]
  %v50 = vld [vmem:[%s0 + $0xc] sm:$0xf]
  %v51 = vld [vmem:[%s0 + $0x10] sm:$0xf]
  %v52 = vld [vmem:[%s0 + $0x14] sm:$0xf]
  %v53 = vld [vmem:[%s0 + $0x18] sm:$0xf]
  %v54 = vld [vmem:[%s0 + $0x1c] sm:$0xf]
  %v55 = vld [vmem:[%s2] sm:$0xf]
  %v56 = vld [vmem:[%s2 + $0x4] sm:$0xf]
  %v57 = vld [vmem:[%s2 + $0x8] sm:$0xf]
  %v58 = vld [vmem:[%s2 + $0xc] sm:$0xf]
  %v59 = vld [vmem:[%s2 + $0x10] sm:$0xf]
  %v60 = vld [vmem:[%s2 + $0x14] sm:$0xf]
  %v61 = vld [vmem:[%s2 + $0x18] sm:$0xf]
  %v62 = vld [vmem:[%s2 + $0x1c] sm:$0xf]
  %v63 = vld [vmem:[%s2 + $0x20] sm:$0xf]
  %v64 = vld [vmem:[%s2 + $0x24] sm:$0xf]
  %v65 = vld [vmem:[%s2 + $0x28] sm:$0xf]
  %v66 = vld [vmem:[%s2 + $0x2c] sm:$0xf]
  %v67 = vld [vmem:[%s2 + $0x30] sm:$0xf]
  %v68 = vld [vmem:[%s2 + $0x34] sm:$0xf]
  %v69 = vld [vmem:[%s2 + $0x38] sm:$0xf]
  %v70 = vld [vmem:[%s2 + $0x3c] sm:$0xf]
  %v71 = vld [vmem:[%s3] sm:$0x1]
  %v72 = vlaneseq
  %v73 = vshrl.u32 %v72, 7
  %v74 = vsub.s32 0, %v73
  %v75 = vrot.slane %v71, %v74
  %v84 = vunpack.c.l.b16 %v47
  %v85 = vunpack.c.l.b16 %v48
  %v86 = vunpack.c.l.b16 %v49
  %v87 = vunpack.c.l.b16 %v50
  %v88 = vunpack.c.l.b16 %v51
  %v89 = vunpack.c.l.b16 %v52
  %v90 = vunpack.c.l.b16 %v53
  %v91 = vunpack.c.l.b16 %v54
  %v92 = vpack.c.b16 %v85, %v84
  %v93 = vpack.c.b16 %v87, %v86
  %v94 = vpack.c.b16 %v89, %v88
  %v95 = vpack.c.b16 %v91, %v90
  %v116 = vunpack.c.l.b16 %v55
  %v117 = vunpack.c.l.b16 %v56
  %v118 = vunpack.c.l.b16 %v57
  %v119 = vunpack.c.l.b16 %v58
  %v120 = vunpack.c.l.b16 %v59
  %v121 = vunpack.c.l.b16 %v60
  %v122 = vunpack.c.l.b16 %v61
  %v123 = vunpack.c.l.b16 %v62
  %v124 = vunpack.c.l.b16 %v63
  %v125 = vunpack.c.l.b16 %v64
  %v126 = vunpack.c.l.b16 %v65
  %v127 = vunpack.c.l.b16 %v66
  %v128 = vunpack.c.l.b16 %v67
  %v129 = vunpack.c.l.b16 %v68
  %v130 = vunpack.c.l.b16 %v69
  %v131 = vunpack.c.l.b16 %v70
  %v132 = vpack.c.b16 %v117, %v116
  %v133 = vpack.c.b16 %v119, %v118
  %v134 = vpack.c.b16 %v121, %v120
  %v135 = vpack.c.b16 %v123, %v122
  %v136 = vpack.c.b16 %v125, %v124
  %v137 = vpack.c.b16 %v127, %v126
  %v138 = vpack.c.b16 %v129, %v128
  %v139 = vpack.c.b16 %v131, %v130
  %148 = vmatprep.subr.bf16.mxu0 0
  %149 = vmatpush1.bf16.msra.mxu0 %v132
  %150 = vmatprep.subr.bf16.mxu0 0
  %151 = vmatpush1.bf16.msra.mxu0 %v133
  %152 = vmatprep.subr.bf16.mxu0 0
  %153 = vmatpush1.bf16.msra.mxu0 %v134
  %154 = vmatprep.subr.bf16.mxu0 0
  %155 = vmatpush1.bf16.msra.mxu0 %v135
  %156 = vmatprep.subr.bf16.mxu0 0
  %157 = vmatpush1.bf16.msra.mxu0 %v136
  %158 = vmatprep.subr.bf16.mxu0 0
  %159 = vmatpush1.bf16.msra.mxu0 %v137
  %160 = vmatprep.subr.bf16.mxu0 0
  %161 = vmatpush1.bf16.msra.mxu0 %v138
  %162 = vmatprep.subr.bf16.mxu0 0
  %163 = vmatpush1.bf16.msra.mxu0 %v139
  %164 = vmatprep.subr.bf16.mxu0 0
  %165 = vmatpush1.bf16.msra.mxu0 0
  %166 = vmatprep.subr.bf16.mxu0 0
  %167 = vmatpush1.bf16.msra.mxu0 0
  %168 = vmatprep.subr.bf16.mxu0 0
  %169 = vmatpush1.bf16.msra.mxu0 0
  %170 = vmatprep.subr.bf16.mxu0 0
  %171 = vmatpush1.bf16.msra.mxu0 0
  %172 = vmatprep.subr.bf16.mxu0 0
  %173 = vmatpush1.bf16.msra.mxu0 0
  %174 = vmatprep.subr.bf16.mxu0 0
  %175 = vmatpush1.bf16.msra.mxu0 0
  %176 = vmatprep.subr.bf16.mxu0 0
  %177 = vmatpush1.bf16.msra.mxu0 0
  %178 = vmatprep.subr.bf16.mxu0 0
  %179 = vmatpush1.bf16.msra.mxu0 0
  %180 = vmatprep.mubr.bf16.mxu0 0
  %181 = vmatmul.mubr.bf16.gmra.mrb[0].mxu0 %v92
  %v182 = vpop.f32.mrb[0].mxu0
  %v183 = vadd.f32 %v75, %v182
  %v184 = vpop.f32.mrb[0].mxu0
  %v185 = vpop.f32.mrb[0].mxu0
  %v186 = vadd.f32 %v75, %v185
  %v187 = vpop.f32.mrb[0].mxu0
  %188 = vmatprep.mubr.bf16.mxu0 0
  %189 = vmatmul.mubr.bf16.gmra.mrb[0].mxu0 %v93
  %v190 = vpop.f32.mrb[0].mxu0
  %v191 = vadd.f32 %v75, %v190
  %v192 = vpop.f32.mrb[0].mxu0
  %v193 = vpop.f32.mrb[0].mxu0
  %v194 = vadd.f32 %v75, %v193
  %v195 = vpop.f32.mrb[0].mxu0
  %196 = vmatprep.mubr.bf16.mxu0 0
  %197 = vmatmul.mubr.bf16.gmra.mrb[0].mxu0 %v94
  %v198 = vpop.f32.mrb[0].mxu0
  %v199 = vadd.f32 %v75, %v198
  %v200 = vpop.f32.mrb[0].mxu0
  %v201 = vpop.f32.mrb[0].mxu0
  %v202 = vadd.f32 %v75, %v201
  %v203 = vpop.f32.mrb[0].mxu0
  %204 = vmatprep.mubr.bf16.mxu0 0
  %205 = vmatmul.mubr.bf16.gmra.mrb[0].mxu0 %v95
  %v206 = vpop.f32.mrb[0].mxu0
  %v207 = vadd.f32 %v75, %v206
  %v208 = vpop.f32.mrb[0].mxu0
  %v209 = vpop.f32.mrb[0].mxu0
  %v210 = vadd.f32 %v75, %v209
  %v211 = vpop.f32.mrb[0].mxu0
  %212 = vdwg.mxu0
  %213 = vadd.xlane.f32.xlu0 %v183
  %v214 = vpop.xlane.xlu0 %213
  %215 = vadd.xlane.f32.xlu0 %v186
  %v216 = vpop.xlane.xlu0 %215
  %217 = vadd.xlane.f32.xlu0 %v191
  %v218 = vpop.xlane.xlu0 %217
  %219 = vadd.xlane.f32.xlu0 %v194
  %v220 = vpop.xlane.xlu0 %219
  %221 = vadd.xlane.f32.xlu0 %v199
  %v222 = vpop.xlane.xlu0 %221
  %223 = vadd.xlane.f32.xlu0 %v202
  %v224 = vpop.xlane.xlu0 %223
  %225 = vadd.xlane.f32.xlu0 %v207
  %v226 = vpop.xlane.xlu0 %225
  %227 = vadd.xlane.f32.xlu0 %v210
  %v228 = vpop.xlane.xlu0 %227
  %v229 = vmul.f32 %v214, 0.03125
  %v230 = vmul.f32 %v216, 0.03125
  %v231 = vmul.f32 %v218, 0.03125
  %v232 = vmul.f32 %v220, 0.03125
  %v233 = vmul.f32 %v222, 0.03125
  %v234 = vmul.f32 %v224, 0.03125
  %v235 = vmul.f32 %v226, 0.03125
  %v236 = vmul.f32 %v228, 0.03125
  %v237 = vmul.f32 %v183, %v183
  %v238 = vmul.f32 %v186, %v186
  %v239 = vmul.f32 %v191, %v191
  %v240 = vmul.f32 %v194, %v194
  %v241 = vmul.f32 %v199, %v199
  %v242 = vmul.f32 %v202, %v202
  %v243 = vmul.f32 %v207, %v207
  %v244 = vmul.f32 %v210, %v210
  %245 = vadd.xlane.f32.xlu0 %v237
  %v246 = vpop.xlane.xlu0 %245
  %247 = vadd.xlane.f32.xlu0 %v238
  %v248 = vpop.xlane.xlu0 %247
  %249 = vadd.xlane.f32.xlu0 %v239
  %v250 = vpop.xlane.xlu0 %249
  %251 = vadd.xlane.f32.xlu0 %v240
  %v252 = vpop.xlane.xlu0 %251
  %253 = vadd.xlane.f32.xlu0 %v241
  %v254 = vpop.xlane.xlu0 %253
  %255 = vadd.xlane.f32.xlu0 %v242
  %v256 = vpop.xlane.xlu0 %255
  %257 = vadd.xlane.f32.xlu0 %v243
  %v258 = vpop.xlane.xlu0 %257
  %259 = vadd.xlane.f32.xlu0 %v244
  %v260 = vpop.xlane.xlu0 %259
  %v261 = vmul.f32 %v246, 0.03125
  %v262 = vmul.f32 %v248, 0.03125
  %v263 = vmul.f32 %v250, 0.03125
  %v264 = vmul.f32 %v252, 0.03125
  %v265 = vmul.f32 %v254, 0.03125
  %v266 = vmul.f32 %v256, 0.03125
  %v267 = vmul.f32 %v258, 0.03125
  %v268 = vmul.f32 %v260, 0.03125
  %v269 = vmul.f32 %v229, %v229
  %v270 = vmul.f32 %v230, %v230
  %v271 = vmul.f32 %v231, %v231
  %v272 = vmul.f32 %v232, %v232
  %v273 = vmul.f32 %v233, %v233
  %v274 = vmul.f32 %v234, %v234
  %v275 = vmul.f32 %v235, %v235
  %v276 = vmul.f32 %v236, %v236
  %v277 = vsub.f32 %v261, %v269
  %v278 = vsub.f32 %v262, %v270
  %v279 = vsub.f32 %v263, %v271
  %v280 = vsub.f32 %v264, %v272
  %v281 = vsub.f32 %v265, %v273
  %v282 = vsub.f32 %v266, %v274
  %v283 = vsub.f32 %v267, %v275
  %v284 = vsub.f32 %v268, %v276
  %v285 = vmax.f32 %v277, 0.0
  %v286 = vmax.f32 %v278, 0.0
  %v287 = vmax.f32 %v279, 0.0
  %v288 = vmax.f32 %v280, 0.0
  %v289 = vmax.f32 %v281, 0.0
  %v290 = vmax.f32 %v282, 0.0
  %v291 = vmax.f32 %v283, 0.0
  %v292 = vmax.f32 %v284, 0.0
  %v293 = vsub.f32 %v183, %v229
  %v294 = vsub.f32 %v186, %v230
  %v295 = vsub.f32 %v191, %v231
  %v296 = vsub.f32 %v194, %v232
  %v297 = vsub.f32 %v199, %v233
  %v298 = vsub.f32 %v202, %v234
  %v299 = vsub.f32 %v207, %v235
  %v300 = vsub.f32 %v210, %v236
  %v301 = vadd.f32 %v285, 1e-05
  %v302 = vadd.f32 %v286, 1e-05
  %v303 = vadd.f32 %v287, 1e-05
  %v304 = vadd.f32 %v288, 1e-05
  %v305 = vadd.f32 %v289, 1e-05
  %v306 = vadd.f32 %v290, 1e-05
  %v307 = vadd.f32 %v291, 1e-05
  %v308 = vadd.f32 %v292, 1e-05
  %v309 = vrsqrt.pop %v301
  %v310 = vrsqrt.pop %v302
  %v311 = vrsqrt.pop %v303
  %v312 = vrsqrt.pop %v304
  %v313 = vrsqrt.pop %v305
  %v314 = vrsqrt.pop %v306
  %v315 = vrsqrt.pop %v307
  %v316 = vrsqrt.pop %v308
  %v317 = vmul.f32 %v293, %v309
  %v318 = vmul.f32 %v294, %v310
  %v319 = vmul.f32 %v295, %v311
  %v320 = vmul.f32 %v296, %v312
  %v321 = vmul.f32 %v297, %v313
  %v322 = vmul.f32 %v298, %v314
  %v323 = vmul.f32 %v299, %v315
  %v324 = vmul.f32 %v300, %v316
  %v325 = vld [vmem:[%s3 + $0x1] sm:$0x1]
  %v326 = vlaneseq
  %v327 = vshrl.u32 %v326, 7
  %v328 = vsub.s32 0, %v327
  %v329 = vrot.slane %v325, %v328
  %v330 = vmul.f32 %v317, %v329
  %v331 = vmul.f32 %v318, %v329
  %v332 = vmul.f32 %v319, %v329
  %v333 = vmul.f32 %v320, %v329
  %v334 = vmul.f32 %v321, %v329
  %v335 = vmul.f32 %v322, %v329
  %v336 = vmul.f32 %v323, %v329
  %v337 = vmul.f32 %v324, %v329
  %v338 = vld [vmem:[%s3 + $0x2] sm:$0x1]
  %v339 = vlaneseq
  %v340 = vshrl.u32 %v339, 7
  %v341 = vsub.s32 0, %v340
  %v342 = vrot.slane %v338, %v341
  %v343 = vadd.f32 %v330, %v342
  %v344 = vadd.f32 %v331, %v342
  %v345 = vadd.f32 %v332, %v342
  %v346 = vadd.f32 %v333, %v342
  %v347 = vadd.f32 %v334, %v342
  %v348 = vadd.f32 %v335, %v342
  %v349 = vadd.f32 %v336, %v342
  %v350 = vadd.f32 %v337, %v342
  %v351 = vmul.f32 %v343, 0.5
  %v352 = vmul.f32 %v344, 0.5
  %v353 = vmul.f32 %v345, 0.5
  %v354 = vmul.f32 %v346, 0.5
  %v355 = vmul.f32 %v347, 0.5
  %v356 = vmul.f32 %v348, 0.5
  %v357 = vmul.f32 %v349, 0.5
  %v358 = vmul.f32 %v350, 0.5
  %v359 = vmul.f32 %v343, 0.70710677
  %v360 = vmul.f32 %v344, 0.70710677
  %v361 = vmul.f32 %v345, 0.70710677
  %v362 = vmul.f32 %v346, 0.70710677
  %v363 = vmul.f32 %v347, 0.70710677
  %v364 = vmul.f32 %v348, 0.70710677
  %v365 = vmul.f32 %v349, 0.70710677
  %v366 = vmul.f32 %v350, 0.70710677
  %v367 = verf.f32.pop %v359
  %v368 = verf.f32.pop %v360
  %v369 = verf.f32.pop %v361
  %v370 = verf.f32.pop %v362
  %v371 = verf.f32.pop %v363
  %v372 = verf.f32.pop %v364
  %v373 = verf.f32.pop %v365
  %v374 = verf.f32.pop %v366
  %v375 = vadd.f32 %v367, 1.0
  %v376 = vadd.f32 %v368, 1.0
  %v377 = vadd.f32 %v369, 1.0
  %v378 = vadd.f32 %v370, 1.0
  %v379 = vadd.f32 %v371, 1.0
  %v380 = vadd.f32 %v372, 1.0
  %v381 = vadd.f32 %v373, 1.0
  %v382 = vadd.f32 %v374, 1.0
  %v383 = vmul.f32 %v351, %v375
  %v384 = vmul.f32 %v352, %v376
  %v385 = vmul.f32 %v353, %v377
  %v386 = vmul.f32 %v354, %v378
  %v387 = vmul.f32 %v355, %v379
  %v388 = vmul.f32 %v356, %v380
  %v389 = vmul.f32 %v357, %v381
  %v390 = vmul.f32 %v358, %v382
  %v391 = vld [vmem:[%s3 + $0x3] sm:$0x1]
  %v392 = vld [vmem:[%s1] sm:$0x1]
  %v393 = vld [vmem:[%s1 + $0x1] sm:$0x1]
  %v394 = vld [vmem:[%s1 + $0x2] sm:$0x1]
  %v395 = vld [vmem:[%s1 + $0x3] sm:$0x1]
  %v396 = vld [vmem:[%s1 + $0x4] sm:$0x1]
  %v397 = vld [vmem:[%s1 + $0x5] sm:$0x1]
  %v398 = vld [vmem:[%s1 + $0x6] sm:$0x1]
  %v399 = vld [vmem:[%s1 + $0x7] sm:$0x1]
  %400 = vmatprep.subr.mxu0 0.0
  %401 = vmatpush1.xpose.msra.mxu0 %v383
  %402 = vmatprep.subr.mxu0 0.0
  %403 = vmatpush1.xpose.msra.mxu0 0.0
  %404 = vmatprep.subr.mxu0 0.0
  %405 = vmatpush1.xpose.msra.mxu0 0.0
  %406 = vmatprep.subr.mxu0 0.0
  %407 = vmatpush1.xpose.msra.mxu0 0.0
  %408 = vmatprep.subr.mxu0 0.0
  %409 = vmatpush1.xpose.msra.mxu0 0.0
  %410 = vmatprep.subr.mxu0 0.0
  %411 = vmatpush1.xpose.msra.mxu0 0.0
  %412 = vmatprep.subr.mxu0 0.0
  %413 = vmatpush1.xpose.msra.mxu0 0.0
  %414 = vmatprep.subr.mxu0 0.0
  %415 = vmatpush1.xpose.msra.mxu0 0.0
  %416 = vmatprep.subr.mxu0 0.0
  %417 = vmatpush1.xpose.msra.mxu0 0.0
  %418 = vmatprep.subr.mxu0 0.0
  %419 = vmatpush1.xpose.msra.mxu0 0.0
  %420 = vmatprep.subr.mxu0 0.0
  %421 = vmatpush1.xpose.msra.mxu0 0.0
  %422 = vmatprep.subr.mxu0 0.0
  %423 = vmatpush1.xpose.msra.mxu0 0.0
  %424 = vmatprep.subr.mxu0 0.0
  %425 = vmatpush1.xpose.msra.mxu0 0.0
  %426 = vmatprep.subr.mxu0 0.0
  %427 = vmatpush1.xpose.msra.mxu0 0.0
  %428 = vmatprep.subr.mxu0 0.0
  %429 = vmatpush1.xpose.msra.mxu0 0.0
  %430 = vmatprep.subr.mxu0 0.0
  %431 = vmatpush1.xpose.msra.mxu0 0.0
  %432 = vmatprep.subr.mxu0 0.0
  %433 = vmatpush1.xpose.msra.mxu0 0.0
  %434 = vmatprep.subr.mxu0 0.0
  %435 = vmatpush1.xpose.msra.mxu0 0.0
  %436 = vmatprep.subr.mxu0 0.0
  %437 = vmatpush1.xpose.msra.mxu0 0.0
  %438 = vmatprep.subr.mxu0 0.0
  %439 = vmatpush1.xpose.msra.mxu0 0.0
  %440 = vmatprep.subr.mxu0 0.0
  %441 = vmatpush1.xpose.msra.mxu0 0.0
  %442 = vmatprep.subr.mxu0 0.0
  %443 = vmatpush1.xpose.msra.mxu0 0.0
  %444 = vmatprep.subr.mxu0 0.0
  %445 = vmatpush1.xpose.msra.mxu0 0.0
  %446 = vmatprep.subr.mxu0 0.0
  %447 = vmatpush1.xpose.msra.mxu0 0.0
  %448 = vmatprep.subr.mxu0 0.0
  %449 = vmatpush1.xpose.msra.mxu0 0.0
  %450 = vmatprep.subr.mxu0 0.0
  %451 = vmatpush1.xpose.msra.mxu0 0.0
  %452 = vmatprep.subr.mxu0 0.0
  %453 = vmatpush1.xpose.msra.mxu0 0.0
  %454 = vmatprep.subr.mxu0 0.0
  %455 = vmatpush1.xpose.msra.mxu0 0.0
  %456 = vmatprep.subr.mxu0 0.0
  %457 = vmatpush1.xpose.msra.mxu0 0.0
  %458 = vmatprep.subr.mxu0 0.0
  %459 = vmatpush1.xpose.msra.mxu0 0.0
  %460 = vmatprep.subr.mxu0 0.0
  %461 = vmatpush1.xpose.msra.mxu0 0.0
  %462 = vmatprep.subr.mxu0 0.0
  %463 = vmatpush1.xpose.msra.mxu0 0.0
  %464 = vmatprep.mubr.f32.mxu0 0.0
  %465 = vmatmul.mubr.f32.gmra.mrb[0].mxu0 %v391
  %v466 = vpop.f32.mrb[0].mxu0
  %v467 = vadd.f32 %v392, %v466
  %v468 = vpop.f32.mrb[0].mxu0
  %469 = vdwg.mxu0
  %470 = vmatprep.subr.mxu0 0.0
  %471 = vmatpush1.xpose.msra.mxu0 %v384
  %472 = vmatprep.subr.mxu0 0.0
  %473 = vmatpush1.xpose.msra.mxu0 0.0
  %474 = vmatprep.subr.mxu0 0.0
  %475 = vmatpush1.xpose.msra.mxu0 0.0
  %476 = vmatprep.subr.mxu0 0.0
  %477 = vmatpush1.xpose.msra.mxu0 0.0
  %478 = vmatprep.subr.mxu0 0.0
  %479 = vmatpush1.xpose.msra.mxu0 0.0
  %480 = vmatprep.subr.mxu0 0.0
  %481 = vmatpush1.xpose.msra.mxu0 0.0
  %482 = vmatprep.subr.mxu0 0.0
  %483 = vmatpush1.xpose.msra.mxu0 0.0
  %484 = vmatprep.subr.mxu0 0.0
  %485 = vmatpush1.xpose.msra.mxu0 0.0
  %486 = vmatprep.subr.mxu0 0.0
  %487 = vmatpush1.xpose.msra.mxu0 0.0
  %488 = vmatprep.subr.mxu0 0.0
  %489 = vmatpush1.xpose.msra.mxu0 0.0
  %490 = vmatprep.subr.mxu0 0.0
  %491 = vmatpush1.xpose.msra.mxu0 0.0
  %492 = vmatprep.subr.mxu0 0.0
  %493 = vmatpush1.xpose.msra.mxu0 0.0
  %494 = vmatprep.subr.mxu0 0.0
  %495 = vmatpush1.xpose.msra.mxu0 0.0
  %496 = vmatprep.subr.mxu0 0.0
  %497 = vmatpush1.xpose.msra.mxu0 0.0
  %498 = vmatprep.subr.mxu0 0.0
  %499 = vmatpush1.xpose.msra.mxu0 0.0
  %500 = vmatprep.subr.mxu0 0.0
  %501 = vmatpush1.xpose.msra.mxu0 0.0
  %502 = vmatprep.subr.mxu0 0.0
  %503 = vmatpush1.xpose.msra.mxu0 0.0
  %504 = vmatprep.subr.mxu0 0.0
  %505 = vmatpush1.xpose.msra.mxu0 0.0
  %506 = vmatprep.subr.mxu0 0.0
  %507 = vmatpush1.xpose.msra.mxu0 0.0
  %508 = vmatprep.subr.mxu0 0.0
  %509 = vmatpush1.xpose.msra.mxu0 0.0
  %510 = vmatprep.subr.mxu0 0.0
  %511 = vmatpush1.xpose.msra.mxu0 0.0
  %512 = vmatprep.subr.mxu0 0.0
  %513 = vmatpush1.xpose.msra.mxu0 0.0
  %514 = vmatprep.subr.mxu0 0.0
  %515 = vmatpush1.xpose.msra.mxu0 0.0
  %516 = vmatprep.subr.mxu0 0.0
  %517 = vmatpush1.xpose.msra.mxu0 0.0
  %518 = vmatprep.subr.mxu0 0.0
  %519 = vmatpush1.xpose.msra.mxu0 0.0
  %520 = vmatprep.subr.mxu0 0.0
  %521 = vmatpush1.xpose.msra.mxu0 0.0
  %522 = vmatprep.subr.mxu0 0.0
  %523 = vmatpush1.xpose.msra.mxu0 0.0
  %524 = vmatprep.subr.mxu0 0.0
  %525 = vmatpush1.xpose.msra.mxu0 0.0
  %526 = vmatprep.subr.mxu0 0.0
  %527 = vmatpush1.xpose.msra.mxu0 0.0
  %528 = vmatprep.subr.mxu0 0.0
  %529 = vmatpush1.xpose.msra.mxu0 0.0
  %530 = vmatprep.subr.mxu0 0.0
  %531 = vmatpush1.xpose.msra.mxu0 0.0
  %532 = vmatprep.subr.mxu0 0.0
  %533 = vmatpush1.xpose.msra.mxu0 0.0
  %534 = vmatprep.mubr.f32.mxu0 0.0
  %535 = vmatmul.mubr.f32.gmra.mrb[0].mxu0 %v391
  %v536 = vpop.f32.mrb[0].mxu0
  %v537 = vadd.f32 %v393, %v536
  %v538 = vpop.f32.mrb[0].mxu0
  %539 = vdwg.mxu0
  %540 = vmatprep.subr.mxu0 0.0
  %541 = vmatpush1.xpose.msra.mxu0 %v385
  %542 = vmatprep.subr.mxu0 0.0
  %543 = vmatpush1.xpose.msra.mxu0 0.0
  %544 = vmatprep.subr.mxu0 0.0
  %545 = vmatpush1.xpose.msra.mxu0 0.0
  %546 = vmatprep.subr.mxu0 0.0
  %547 = vmatpush1.xpose.msra.mxu0 0.0
  %548 = vmatprep.subr.mxu0 0.0
  %549 = vmatpush1.xpose.msra.mxu0 0.0
  %550 = vmatprep.subr.mxu0 0.0
  %551 = vmatpush1.xpose.msra.mxu0 0.0
  %552 = vmatprep.subr.mxu0 0.0
  %553 = vmatpush1.xpose.msra.mxu0 0.0
  %554 = vmatprep.subr.mxu0 0.0
  %555 = vmatpush1.xpose.msra.mxu0 0.0
  %556 = vmatprep.subr.mxu0 0.0
  %557 = vmatpush1.xpose.msra.mxu0 0.0
  %558 = vmatprep.subr.mxu0 0.0
  %559 = vmatpush1.xpose.msra.mxu0 0.0
  %560 = vmatprep.subr.mxu0 0.0
  %561 = vmatpush1.xpose.msra.mxu0 0.0
  %562 = vmatprep.subr.mxu0 0.0
  %563 = vmatpush1.xpose.msra.mxu0 0.0
  %564 = vmatprep.subr.mxu0 0.0
  %565 = vmatpush1.xpose.msra.mxu0 0.0
  %566 = vmatprep.subr.mxu0 0.0
  %567 = vmatpush1.xpose.msra.mxu0 0.0
  %568 = vmatprep.subr.mxu0 0.0
  %569 = vmatpush1.xpose.msra.mxu0 0.0
  %570 = vmatprep.subr.mxu0 0.0
  %571 = vmatpush1.xpose.msra.mxu0 0.0
  %572 = vmatprep.subr.mxu0 0.0
  %573 = vmatpush1.xpose.msra.mxu0 0.0
  %574 = vmatprep.subr.mxu0 0.0
  %575 = vmatpush1.xpose.msra.mxu0 0.0
  %576 = vmatprep.subr.mxu0 0.0
  %577 = vmatpush1.xpose.msra.mxu0 0.0
  %578 = vmatprep.subr.mxu0 0.0
  %579 = vmatpush1.xpose.msra.mxu0 0.0
  %580 = vmatprep.subr.mxu0 0.0
  %581 = vmatpush1.xpose.msra.mxu0 0.0
  %582 = vmatprep.subr.mxu0 0.0
  %583 = vmatpush1.xpose.msra.mxu0 0.0
  %584 = vmatprep.subr.mxu0 0.0
  %585 = vmatpush1.xpose.msra.mxu0 0.0
  %586 = vmatprep.subr.mxu0 0.0
  %587 = vmatpush1.xpose.msra.mxu0 0.0
  %588 = vmatprep.subr.mxu0 0.0
  %589 = vmatpush1.xpose.msra.mxu0 0.0
  %590 = vmatprep.subr.mxu0 0.0
  %591 = vmatpush1.xpose.msra.mxu0 0.0
  %592 = vmatprep.subr.mxu0 0.0
  %593 = vmatpush1.xpose.msra.mxu0 0.0
  %594 = vmatprep.subr.mxu0 0.0
  %595 = vmatpush1.xpose.msra.mxu0 0.0
  %596 = vmatprep.subr.mxu0 0.0
  %597 = vmatpush1.xpose.msra.mxu0 0.0
  %598 = vmatprep.subr.mxu0 0.0
  %599 = vmatpush1.xpose.msra.mxu0 0.0
  %600 = vmatprep.subr.mxu0 0.0
  %601 = vmatpush1.xpose.msra.mxu0 0.0
  %602 = vmatprep.subr.mxu0 0.0
  %603 = vmatpush1.xpose.msra.mxu0 0.0
  %604 = vmatprep.mubr.f32.mxu0 0.0
  %605 = vmatmul.mubr.f32.gmra.mrb[0].mxu0 %v391
  %v606 = vpop.f32.mrb[0].mxu0
  %v607 = vadd.f32 %v394, %v606
  %v608 = vpop.f32.mrb[0].mxu0
  %609 = vdwg.mxu0
  %610 = vmatprep.subr.mxu0 0.0
  %611 = vmatpush1.xpose.msra.mxu0 %v386
  %612 = vmatprep.subr.mxu0 0.0
  %613 = vmatpush1.xpose.msra.mxu0 0.0
  %614 = vmatprep.subr.mxu0 0.0
  %615 = vmatpush1.xpose.msra.mxu0 0.0
  %616 = vmatprep.subr.mxu0 0.0
  %617 = vmatpush1.xpose.msra.mxu0 0.0
  %618 = vmatprep.subr.mxu0 0.0
  %619 = vmatpush1.xpose.msra.mxu0 0.0
  %620 = vmatprep.subr.mxu0 0.0
  %621 = vmatpush1.xpose.msra.mxu0 0.0
  %622 = vmatprep.subr.mxu0 0.0
  %623 = vmatpush1.xpose.msra.mxu0 0.0
  %624 = vmatprep.subr.mxu0 0.0
  %625 = vmatpush1.xpose.msra.mxu0 0.0
  %626 = vmatprep.subr.mxu0 0.0
  %627 = vmatpush1.xpose.msra.mxu0 0.0
  %628 = vmatprep.subr.mxu0 0.0
  %629 = vmatpush1.xpose.msra.mxu0 0.0
  %630 = vmatprep.subr.mxu0 0.0
  %631 = vmatpush1.xpose.msra.mxu0 0.0
  %632 = vmatprep.subr.mxu0 0.0
  %633 = vmatpush1.xpose.msra.mxu0 0.0
  %634 = vmatprep.subr.mxu0 0.0
  %635 = vmatpush1.xpose.msra.mxu0 0.0
  %636 = vmatprep.subr.mxu0 0.0
  %637 = vmatpush1.xpose.msra.mxu0 0.0
  %638 = vmatprep.subr.mxu0 0.0
  %639 = vmatpush1.xpose.msra.mxu0 0.0
  %640 = vmatprep.subr.mxu0 0.0
  %641 = vmatpush1.xpose.msra.mxu0 0.0
  %642 = vmatprep.subr.mxu0 0.0
  %643 = vmatpush1.xpose.msra.mxu0 0.0
  %644 = vmatprep.subr.mxu0 0.0
  %645 = vmatpush1.xpose.msra.mxu0 0.0
  %646 = vmatprep.subr.mxu0 0.0
  %647 = vmatpush1.xpose.msra.mxu0 0.0
  %648 = vmatprep.subr.mxu0 0.0
  %649 = vmatpush1.xpose.msra.mxu0 0.0
  %650 = vmatprep.subr.mxu0 0.0
  %651 = vmatpush1.xpose.msra.mxu0 0.0
  %652 = vmatprep.subr.mxu0 0.0
  %653 = vmatpush1.xpose.msra.mxu0 0.0
  %654 = vmatprep.subr.mxu0 0.0
  %655 = vmatpush1.xpose.msra.mxu0 0.0
  %656 = vmatprep.subr.mxu0 0.0
  %657 = vmatpush1.xpose.msra.mxu0 0.0
  %658 = vmatprep.subr.mxu0 0.0
  %659 = vmatpush1.xpose.msra.mxu0 0.0
  %660 = vmatprep.subr.mxu0 0.0
  %661 = vmatpush1.xpose.msra.mxu0 0.0
  %662 = vmatprep.subr.mxu0 0.0
  %663 = vmatpush1.xpose.msra.mxu0 0.0
  %664 = vmatprep.subr.mxu0 0.0
  %665 = vmatpush1.xpose.msra.mxu0 0.0
  %666 = vmatprep.subr.mxu0 0.0
  %667 = vmatpush1.xpose.msra.mxu0 0.0
  %668 = vmatprep.subr.mxu0 0.0
  %669 = vmatpush1.xpose.msra.mxu0 0.0
  %670 = vmatprep.subr.mxu0 0.0
  %671 = vmatpush1.xpose.msra.mxu0 0.0
  %672 = vmatprep.subr.mxu0 0.0
  %673 = vmatpush1.xpose.msra.mxu0 0.0
  %674 = vmatprep.mubr.f32.mxu0 0.0
  %675 = vmatmul.mubr.f32.gmra.mrb[0].mxu0 %v391
  %v676 = vpop.f32.mrb[0].mxu0
  %v677 = vadd.f32 %v395, %v676
  %v678 = vpop.f32.mrb[0].mxu0
  %679 = vdwg.mxu0
  %680 = vmatprep.subr.mxu0 0.0
  %681 = vmatpush1.xpose.msra.mxu0 %v387
  %682 = vmatprep.subr.mxu0 0.0
  %683 = vmatpush1.xpose.msra.mxu0 0.0
  %684 = vmatprep.subr.mxu0 0.0
  %685 = vmatpush1.xpose.msra.mxu0 0.0
  %686 = vmatprep.subr.mxu0 0.0
  %687 = vmatpush1.xpose.msra.mxu0 0.0
  %688 = vmatprep.subr.mxu0 0.0
  %689 = vmatpush1.xpose.msra.mxu0 0.0
  %690 = vmatprep.subr.mxu0 0.0
  %691 = vmatpush1.xpose.msra.mxu0 0.0
  %692 = vmatprep.subr.mxu0 0.0
  %693 = vmatpush1.xpose.msra.mxu0 0.0
  %694 = vmatprep.subr.mxu0 0.0
  %695 = vmatpush1.xpose.msra.mxu0 0.0
  %696 = vmatprep.subr.mxu0 0.0
  %697 = vmatpush1.xpose.msra.mxu0 0.0
  %698 = vmatprep.subr.mxu0 0.0
  %699 = vmatpush1.xpose.msra.mxu0 0.0
  %700 = vmatprep.subr.mxu0 0.0
  %701 = vmatpush1.xpose.msra.mxu0 0.0
  %702 = vmatprep.subr.mxu0 0.0
  %703 = vmatpush1.xpose.msra.mxu0 0.0
  %704 = vmatprep.subr.mxu0 0.0
  %705 = vmatpush1.xpose.msra.mxu0 0.0
  %706 = vmatprep.subr.mxu0 0.0
  %707 = vmatpush1.xpose.msra.mxu0 0.0
  %708 = vmatprep.subr.mxu0 0.0
  %709 = vmatpush1.xpose.msra.mxu0 0.0
  %710 = vmatprep.subr.mxu0 0.0
  %711 = vmatpush1.xpose.msra.mxu0 0.0
  %712 = vmatprep.subr.mxu0 0.0
  %713 = vmatpush1.xpose.msra.mxu0 0.0
  %714 = vmatprep.subr.mxu0 0.0
  %715 = vmatpush1.xpose.msra.mxu0 0.0
  %716 = vmatprep.subr.mxu0 0.0
  %717 = vmatpush1.xpose.msra.mxu0 0.0
  %718 = vmatprep.subr.mxu0 0.0
  %719 = vmatpush1.xpose.msra.mxu0 0.0
  %720 = vmatprep.subr.mxu0 0.0
  %721 = vmatpush1.xpose.msra.mxu0 0.0
  %722 = vmatprep.subr.mxu0 0.0
  %723 = vmatpush1.xpose.msra.mxu0 0.0
  %724 = vmatprep.subr.mxu0 0.0
  %725 = vmatpush1.xpose.msra.mxu0 0.0
  %726 = vmatprep.subr.mxu0 0.0
  %727 = vmatpush1.xpose.msra.mxu0 0.0
  %728 = vmatprep.subr.mxu0 0.0
  %729 = vmatpush1.xpose.msra.mxu0 0.0
  %730 = vmatprep.subr.mxu0 0.0
  %731 = vmatpush1.xpose.msra.mxu0 0.0
  %732 = vmatprep.subr.mxu0 0.0
  %733 = vmatpush1.xpose.msra.mxu0 0.0
  %734 = vmatprep.subr.mxu0 0.0
  %735 = vmatpush1.xpose.msra.mxu0 0.0
  %736 = vmatprep.subr.mxu0 0.0
  %737 = vmatpush1.xpose.msra.mxu0 0.0
  %738 = vmatprep.subr.mxu0 0.0
  %739 = vmatpush1.xpose.msra.mxu0 0.0
  %740 = vmatprep.subr.mxu0 0.0
  %741 = vmatpush1.xpose.msra.mxu0 0.0
  %742 = vmatprep.subr.mxu0 0.0
  %743 = vmatpush1.xpose.msra.mxu0 0.0
  %744 = vmatprep.mubr.f32.mxu0 0.0
  %745 = vmatmul.mubr.f32.gmra.mrb[0].mxu0 %v391
  %v746 = vpop.f32.mrb[0].mxu0
  %v747 = vadd.f32 %v396, %v746
  %v748 = vpop.f32.mrb[0].mxu0
  %749 = vdwg.mxu0
  %750 = vmatprep.subr.mxu0 0.0
  %751 = vmatpush1.xpose.msra.mxu0 %v388
  %752 = vmatprep.subr.mxu0 0.0
  %753 = vmatpush1.xpose.msra.mxu0 0.0
  %754 = vmatprep.subr.mxu0 0.0
  %755 = vmatpush1.xpose.msra.mxu0 0.0
  %756 = vmatprep.subr.mxu0 0.0
  %757 = vmatpush1.xpose.msra.mxu0 0.0
  %758 = vmatprep.subr.mxu0 0.0
  %759 = vmatpush1.xpose.msra.mxu0 0.0
  %760 = vmatprep.subr.mxu0 0.0
  %761 = vmatpush1.xpose.msra.mxu0 0.0
  %762 = vmatprep.subr.mxu0 0.0
  %763 = vmatpush1.xpose.msra.mxu0 0.0
  %764 = vmatprep.subr.mxu0 0.0
  %765 = vmatpush1.xpose.msra.mxu0 0.0
  %766 = vmatprep.subr.mxu0 0.0
  %767 = vmatpush1.xpose.msra.mxu0 0.0
  %768 = vmatprep.subr.mxu0 0.0
  %769 = vmatpush1.xpose.msra.mxu0 0.0
  %770 = vmatprep.subr.mxu0 0.0
  %771 = vmatpush1.xpose.msra.mxu0 0.0
  %772 = vmatprep.subr.mxu0 0.0
  %773 = vmatpush1.xpose.msra.mxu0 0.0
  %774 = vmatprep.subr.mxu0 0.0
  %775 = vmatpush1.xpose.msra.mxu0 0.0
  %776 = vmatprep.subr.mxu0 0.0
  %777 = vmatpush1.xpose.msra.mxu0 0.0
  %778 = vmatprep.subr.mxu0 0.0
  %779 = vmatpush1.xpose.msra.mxu0 0.0
  %780 = vmatprep.subr.mxu0 0.0
  %781 = vmatpush1.xpose.msra.mxu0 0.0
  %782 = vmatprep.subr.mxu0 0.0
  %783 = vmatpush1.xpose.msra.mxu0 0.0
  %784 = vmatprep.subr.mxu0 0.0
  %785 = vmatpush1.xpose.msra.mxu0 0.0
  %786 = vmatprep.subr.mxu0 0.0
  %787 = vmatpush1.xpose.msra.mxu0 0.0
  %788 = vmatprep.subr.mxu0 0.0
  %789 = vmatpush1.xpose.msra.mxu0 0.0
  %790 = vmatprep.subr.mxu0 0.0
  %791 = vmatpush1.xpose.msra.mxu0 0.0
  %792 = vmatprep.subr.mxu0 0.0
  %793 = vmatpush1.xpose.msra.mxu0 0.0
  %794 = vmatprep.subr.mxu0 0.0
  %795 = vmatpush1.xpose.msra.mxu0 0.0
  %796 = vmatprep.subr.mxu0 0.0
  %797 = vmatpush1.xpose.msra.mxu0 0.0
  %798 = vmatprep.subr.mxu0 0.0
  %799 = vmatpush1.xpose.msra.mxu0 0.0
  %800 = vmatprep.subr.mxu0 0.0
  %801 = vmatpush1.xpose.msra.mxu0 0.0
  %802 = vmatprep.subr.mxu0 0.0
  %803 = vmatpush1.xpose.msra.mxu0 0.0
  %804 = vmatprep.subr.mxu0 0.0
  %805 = vmatpush1.xpose.msra.mxu0 0.0
  %806 = vmatprep.subr.mxu0 0.0
  %807 = vmatpush1.xpose.msra.mxu0 0.0
  %808 = vmatprep.subr.mxu0 0.0
  %809 = vmatpush1.xpose.msra.mxu0 0.0
  %810 = vmatprep.subr.mxu0 0.0
  %811 = vmatpush1.xpose.msra.mxu0 0.0
  %812 = vmatprep.subr.mxu0 0.0
  %813 = vmatpush1.xpose.msra.mxu0 0.0
  %814 = vmatprep.mubr.f32.mxu0 0.0
  %815 = vmatmul.mubr.f32.gmra.mrb[0].mxu0 %v391
  %v816 = vpop.f32.mrb[0].mxu0
  %v817 = vadd.f32 %v397, %v816
  %v818 = vpop.f32.mrb[0].mxu0
  %819 = vdwg.mxu0
  %820 = vmatprep.subr.mxu0 0.0
  %821 = vmatpush1.xpose.msra.mxu0 %v389
  %822 = vmatprep.subr.mxu0 0.0
  %823 = vmatpush1.xpose.msra.mxu0 0.0
  %824 = vmatprep.subr.mxu0 0.0
  %825 = vmatpush1.xpose.msra.mxu0 0.0
  %826 = vmatprep.subr.mxu0 0.0
  %827 = vmatpush1.xpose.msra.mxu0 0.0
  %828 = vmatprep.subr.mxu0 0.0
  %829 = vmatpush1.xpose.msra.mxu0 0.0
  %830 = vmatprep.subr.mxu0 0.0
  %831 = vmatpush1.xpose.msra.mxu0 0.0
  %832 = vmatprep.subr.mxu0 0.0
  %833 = vmatpush1.xpose.msra.mxu0 0.0
  %834 = vmatprep.subr.mxu0 0.0
  %835 = vmatpush1.xpose.msra.mxu0 0.0
  %836 = vmatprep.subr.mxu0 0.0
  %837 = vmatpush1.xpose.msra.mxu0 0.0
  %838 = vmatprep.subr.mxu0 0.0
  %839 = vmatpush1.xpose.msra.mxu0 0.0
  %840 = vmatprep.subr.mxu0 0.0
  %841 = vmatpush1.xpose.msra.mxu0 0.0
  %842 = vmatprep.subr.mxu0 0.0
  %843 = vmatpush1.xpose.msra.mxu0 0.0
  %844 = vmatprep.subr.mxu0 0.0
  %845 = vmatpush1.xpose.msra.mxu0 0.0
  %846 = vmatprep.subr.mxu0 0.0
  %847 = vmatpush1.xpose.msra.mxu0 0.0
  %848 = vmatprep.subr.mxu0 0.0
  %849 = vmatpush1.xpose.msra.mxu0 0.0
  %850 = vmatprep.subr.mxu0 0.0
  %851 = vmatpush1.xpose.msra.mxu0 0.0
  %852 = vmatprep.subr.mxu0 0.0
  %853 = vmatpush1.xpose.msra.mxu0 0.0
  %854 = vmatprep.subr.mxu0 0.0
  %855 = vmatpush1.xpose.msra.mxu0 0.0
  %856 = vmatprep.subr.mxu0 0.0
  %857 = vmatpush1.xpose.msra.mxu0 0.0
  %858 = vmatprep.subr.mxu0 0.0
  %859 = vmatpush1.xpose.msra.mxu0 0.0
  %860 = vmatprep.subr.mxu0 0.0
  %861 = vmatpush1.xpose.msra.mxu0 0.0
  %862 = vmatprep.subr.mxu0 0.0
  %863 = vmatpush1.xpose.msra.mxu0 0.0
  %864 = vmatprep.subr.mxu0 0.0
  %865 = vmatpush1.xpose.msra.mxu0 0.0
  %866 = vmatprep.subr.mxu0 0.0
  %867 = vmatpush1.xpose.msra.mxu0 0.0
  %868 = vmatprep.subr.mxu0 0.0
  %869 = vmatpush1.xpose.msra.mxu0 0.0
  %870 = vmatprep.subr.mxu0 0.0
  %871 = vmatpush1.xpose.msra.mxu0 0.0
  %872 = vmatprep.subr.mxu0 0.0
  %873 = vmatpush1.xpose.msra.mxu0 0.0
  %874 = vmatprep.subr.mxu0 0.0
  %875 = vmatpush1.xpose.msra.mxu0 0.0
  %876 = vmatprep.subr.mxu0 0.0
  %877 = vmatpush1.xpose.msra.mxu0 0.0
  %878 = vmatprep.subr.mxu0 0.0
  %879 = vmatpush1.xpose.msra.mxu0 0.0
  %880 = vmatprep.subr.mxu0 0.0
  %881 = vmatpush1.xpose.msra.mxu0 0.0
  %882 = vmatprep.subr.mxu0 0.0
  %883 = vmatpush1.xpose.msra.mxu0 0.0
  %884 = vmatprep.mubr.f32.mxu0 0.0
  %885 = vmatmul.mubr.f32.gmra.mrb[0].mxu0 %v391
  %v886 = vpop.f32.mrb[0].mxu0
  %v887 = vadd.f32 %v398, %v886
  %v888 = vpop.f32.mrb[0].mxu0
  %889 = vdwg.mxu0
  %890 = vmatprep.subr.mxu0 0.0
  %891 = vmatpush1.xpose.msra.mxu0 %v390
  %892 = vmatprep.subr.mxu0 0.0
  %893 = vmatpush1.xpose.msra.mxu0 0.0
  %894 = vmatprep.subr.mxu0 0.0
  %895 = vmatpush1.xpose.msra.mxu0 0.0
  %896 = vmatprep.subr.mxu0 0.0
  %897 = vmatpush1.xpose.msra.mxu0 0.0
  %898 = vmatprep.subr.mxu0 0.0
  %899 = vmatpush1.xpose.msra.mxu0 0.0
  %900 = vmatprep.subr.mxu0 0.0
  %901 = vmatpush1.xpose.msra.mxu0 0.0
  %902 = vmatprep.subr.mxu0 0.0
  %903 = vmatpush1.xpose.msra.mxu0 0.0
  %904 = vmatprep.subr.mxu0 0.0
  %905 = vmatpush1.xpose.msra.mxu0 0.0
  %906 = vmatprep.subr.mxu0 0.0
  %907 = vmatpush1.xpose.msra.mxu0 0.0
  %908 = vmatprep.subr.mxu0 0.0
  %909 = vmatpush1.xpose.msra.mxu0 0.0
  %910 = vmatprep.subr.mxu0 0.0
  %911 = vmatpush1.xpose.msra.mxu0 0.0
  %912 = vmatprep.subr.mxu0 0.0
  %913 = vmatpush1.xpose.msra.mxu0 0.0
  %914 = vmatprep.subr.mxu0 0.0
  %915 = vmatpush1.xpose.msra.mxu0 0.0
  %916 = vmatprep.subr.mxu0 0.0
  %917 = vmatpush1.xpose.msra.mxu0 0.0
  %918 = vmatprep.subr.mxu0 0.0
  %919 = vmatpush1.xpose.msra.mxu0 0.0
  %920 = vmatprep.subr.mxu0 0.0
  %921 = vmatpush1.xpose.msra.mxu0 0.0
  %922 = vmatprep.subr.mxu0 0.0
  %923 = vmatpush1.xpose.msra.mxu0 0.0
  %924 = vmatprep.subr.mxu0 0.0
  %925 = vmatpush1.xpose.msra.mxu0 0.0
  %926 = vmatprep.subr.mxu0 0.0
  %927 = vmatpush1.xpose.msra.mxu0 0.0
  %928 = vmatprep.subr.mxu0 0.0
  %929 = vmatpush1.xpose.msra.mxu0 0.0
  %930 = vmatprep.subr.mxu0 0.0
  %931 = vmatpush1.xpose.msra.mxu0 0.0
  %932 = vmatprep.subr.mxu0 0.0
  %933 = vmatpush1.xpose.msra.mxu0 0.0
  %934 = vmatprep.subr.mxu0 0.0
  %935 = vmatpush1.xpose.msra.mxu0 0.0
  %936 = vmatprep.subr.mxu0 0.0
  %937 = vmatpush1.xpose.msra.mxu0 0.0
  %938 = vmatprep.subr.mxu0 0.0
  %939 = vmatpush1.xpose.msra.mxu0 0.0
  %940 = vmatprep.subr.mxu0 0.0
  %941 = vmatpush1.xpose.msra.mxu0 0.0
  %942 = vmatprep.subr.mxu0 0.0
  %943 = vmatpush1.xpose.msra.mxu0 0.0
  %944 = vmatprep.subr.mxu0 0.0
  %945 = vmatpush1.xpose.msra.mxu0 0.0
  %946 = vmatprep.subr.mxu0 0.0
  %947 = vmatpush1.xpose.msra.mxu0 0.0
  %948 = vmatprep.subr.mxu0 0.0
  %949 = vmatpush1.xpose.msra.mxu0 0.0
  %950 = vmatprep.subr.mxu0 0.0
  %951 = vmatpush1.xpose.msra.mxu0 0.0
  %952 = vmatprep.subr.mxu0 0.0
  %953 = vmatpush1.xpose.msra.mxu0 0.0
  %954 = vmatprep.mubr.f32.mxu0 0.0
  %955 = vmatmul.mubr.f32.gmra.mrb[0].mxu0 %v391
  %v956 = vpop.f32.mrb[0].mxu0
  %v957 = vadd.f32 %v399, %v956
  %v958 = vpop.f32.mrb[0].mxu0
  %959 = vdwg.mxu0
  %v960 = vld [vmem:[#allocation2] sm:$0x1]
  %v961 = vld [vmem:[#allocation2 + $0x1] sm:$0x1]
  %v962 = vld [vmem:[#allocation2 + $0x2] sm:$0x1]
  %v963 = vld [vmem:[#allocation2 + $0x3] sm:$0x1]
  %v964 = vld [vmem:[#allocation2 + $0x4] sm:$0x1]
  %v965 = vld [vmem:[#allocation2 + $0x5] sm:$0x1]
  %v966 = vld [vmem:[#allocation2 + $0x6] sm:$0x1]
  %v967 = vld [vmem:[#allocation2 + $0x7] sm:$0x1]
  %vm968 = vcmask 57344
  %v969 = vsel %vm968, %v467, -inf
  %970 = vmax.xlane.f32.xlu0 %v969
  %v971 = vpop.xlane.xlu0 %970
  %v972 = vsel %vm968, %v537, -inf
  %973 = vmax.xlane.f32.xlu0 %v972
  %v974 = vpop.xlane.xlu0 %973
  %v975 = vsel %vm968, %v607, -inf
  %976 = vmax.xlane.f32.xlu0 %v975
  %v977 = vpop.xlane.xlu0 %976
  %v978 = vsel %vm968, %v677, -inf
  %979 = vmax.xlane.f32.xlu0 %v978
  %v980 = vpop.xlane.xlu0 %979
  %v981 = vsel %vm968, %v747, -inf
  %982 = vmax.xlane.f32.xlu0 %v981
  %v983 = vpop.xlane.xlu0 %982
  %v984 = vsel %vm968, %v817, -inf
  %985 = vmax.xlane.f32.xlu0 %v984
  %v986 = vpop.xlane.xlu0 %985
  %v987 = vsel %vm968, %v887, -inf
  %988 = vmax.xlane.f32.xlu0 %v987
  %v989 = vpop.xlane.xlu0 %988
  %v990 = vsel %vm968, %v957, -inf
  %991 = vmax.xlane.f32.xlu0 %v990
  %v992 = vpop.xlane.xlu0 %991
  %v993 = vmax.f32 %v960, %v971
  %v994 = vmax.f32 %v961, %v974
  %v995 = vmax.f32 %v962, %v977
  %v996 = vmax.f32 %v963, %v980
  %v997 = vmax.f32 %v964, %v983
  %v998 = vmax.f32 %v965, %v986
  %v999 = vmax.f32 %v966, %v989
  %v1000 = vmax.f32 %v967, %v992
  %v1001 = vsub.f32 %v960, %v993
  %v1002 = vsub.f32 %v961, %v994
  %v1003 = vsub.f32 %v962, %v995
  %v1004 = vsub.f32 %v963, %v996
  %v1005 = vsub.f32 %v964, %v997
  %v1006 = vsub.f32 %v965, %v998
  %v1007 = vsub.f32 %v966, %v999
  %v1008 = vsub.f32 %v967, %v1000
  %v1009 = vmul.f32 %v1001, 1.442695
  %v1010 = vpow.pop %v1009
  %v1011 = vmul.f32 %v1002, 1.442695
  %v1012 = vpow.pop %v1011
  %v1013 = vmul.f32 %v1003, 1.442695
  %v1014 = vpow.pop %v1013
  %v1015 = vmul.f32 %v1004, 1.442695
  %v1016 = vpow.pop %v1015
  %v1017 = vmul.f32 %v1005, 1.442695
  %v1018 = vpow.pop %v1017
  %v1019 = vmul.f32 %v1006, 1.442695
  %v1020 = vpow.pop %v1019
  %v1021 = vmul.f32 %v1007, 1.442695
  %v1022 = vpow.pop %v1021
  %v1023 = vmul.f32 %v1008, 1.442695
  %v1024 = vpow.pop %v1023
  %1026 = vset.pattern.permute.xlu0 0
  %1027 = vperm.xlu0 %1026, %v993
  %v1028 = vpop.permute.xlu0 %1027
  %v1030 = vlaneseq
  %v1031 = vshrl.u32 %v1030, 7
  %v1032 = vsub.s32 0, %v1031
  %v1033 = vrot.slane %v1028, %v1032
  %1035 = vset.pattern.permute.xlu0 0
  %1036 = vperm.xlu0 %1035, %v994
  %v1037 = vpop.permute.xlu0 %1036
  %v1039 = vlaneseq
  %v1040 = vshrl.u32 %v1039, 7
  %v1041 = vsub.s32 0, %v1040
  %v1042 = vrot.slane %v1037, %v1041
  %1044 = vset.pattern.permute.xlu0 0
  %1045 = vperm.xlu0 %1044, %v995
  %v1046 = vpop.permute.xlu0 %1045
  %v1048 = vlaneseq
  %v1049 = vshrl.u32 %v1048, 7
  %v1050 = vsub.s32 0, %v1049
  %v1051 = vrot.slane %v1046, %v1050
  %1053 = vset.pattern.permute.xlu0 0
  %1054 = vperm.xlu0 %1053, %v996
  %v1055 = vpop.permute.xlu0 %1054
  %v1057 = vlaneseq
  %v1058 = vshrl.u32 %v1057, 7
  %v1059 = vsub.s32 0, %v1058
  %v1060 = vrot.slane %v1055, %v1059
  %1062 = vset.pattern.permute.xlu0 0
  %1063 = vperm.xlu0 %1062, %v997
  %v1064 = vpop.permute.xlu0 %1063
  %v1066 = vlaneseq
  %v1067 = vshrl.u32 %v1066, 7
  %v1068 = vsub.s32 0, %v1067
  %v1069 = vrot.slane %v1064, %v1068
  %1071 = vset.pattern.permute.xlu0 0
  %1072 = vperm.xlu0 %1071, %v998
  %v1073 = vpop.permute.xlu0 %1072
  %v1075 = vlaneseq
  %v1076 = vshrl.u32 %v1075, 7
  %v1077 = vsub.s32 0, %v1076
  %v1078 = vrot.slane %v1073, %v1077
  %1080 = vset.pattern.permute.xlu0 0
  %1081 = vperm.xlu0 %1080, %v999
  %v1082 = vpop.permute.xlu0 %1081
  %v1084 = vlaneseq
  %v1085 = vshrl.u32 %v1084, 7
  %v1086 = vsub.s32 0, %v1085
  %v1087 = vrot.slane %v1082, %v1086
  %1089 = vset.pattern.permute.xlu0 0
  %1090 = vperm.xlu0 %1089, %v1000
  %v1091 = vpop.permute.xlu0 %1090
  %v1093 = vlaneseq
  %v1094 = vshrl.u32 %v1093, 7
  %v1095 = vsub.s32 0, %v1094
  %v1096 = vrot.slane %v1091, %v1095
  %v1097 = vsub.f32 %v467, %v1033
  %v1098 = vsub.f32 %v537, %v1042
  %v1099 = vsub.f32 %v607, %v1051
  %v1100 = vsub.f32 %v677, %v1060
  %v1101 = vsub.f32 %v747, %v1069
  %v1102 = vsub.f32 %v817, %v1078
  %v1103 = vsub.f32 %v887, %v1087
  %v1104 = vsub.f32 %v957, %v1096
  %v1105 = vmul.f32 %v1097, 1.442695
  %v1106 = vpow.pop %v1105
  %v1107 = vmul.f32 %v1098, 1.442695
  %v1108 = vpow.pop %v1107
  %v1109 = vmul.f32 %v1099, 1.442695
  %v1110 = vpow.pop %v1109
  %v1111 = vmul.f32 %v1100, 1.442695
  %v1112 = vpow.pop %v1111
  %v1113 = vmul.f32 %v1101, 1.442695
  %v1114 = vpow.pop %v1113
  %v1115 = vmul.f32 %v1102, 1.442695
  %v1116 = vpow.pop %v1115
  %v1117 = vmul.f32 %v1103, 1.442695
  %v1118 = vpow.pop %v1117
  %v1119 = vmul.f32 %v1104, 1.442695
  %v1120 = vpow.pop %v1119
  %v1121 = vld [vmem:[#allocation3] sm:$0x1]
  %v1122 = vld [vmem:[#allocation3 + $0x1] sm:$0x1]
  %v1123 = vld [vmem:[#allocation3 + $0x2] sm:$0x1]
  %v1124 = vld [vmem:[#allocation3 + $0x3] sm:$0x1]
  %v1125 = vld [vmem:[#allocation3 + $0x4] sm:$0x1]
  %v1126 = vld [vmem:[#allocation3 + $0x5] sm:$0x1]
  %v1127 = vld [vmem:[#allocation3 + $0x6] sm:$0x1]
  %v1128 = vld [vmem:[#allocation3 + $0x7] sm:$0x1]
  %v1129 = vmul.f32 %v1010, %v1121
  %v1130 = vmul.f32 %v1012, %v1122
  %v1131 = vmul.f32 %v1014, %v1123
  %v1132 = vmul.f32 %v1016, %v1124
  %v1133 = vmul.f32 %v1018, %v1125
  %v1134 = vmul.f32 %v1020, %v1126
  %v1135 = vmul.f32 %v1022, %v1127
  %v1136 = vmul.f32 %v1024, %v1128
  %v1137 = vsel %vm968, %v1106, 0.0
  %1138 = vadd.xlane.f32.xlu0 %v1137
  %v1139 = vpop.xlane.xlu0 %1138
  %v1140 = vsel %vm968, %v1108, 0.0
  %1141 = vadd.xlane.f32.xlu0 %v1140
  %v1142 = vpop.xlane.xlu0 %1141
  %v1143 = vsel %vm968, %v1110, 0.0
  %1144 = vadd.xlane.f32.xlu0 %v1143
  %v1145 = vpop.xlane.xlu0 %1144
  %v1146 = vsel %vm968, %v1112, 0.0
  %1147 = vadd.xlane.f32.xlu0 %v1146
  %v1148 = vpop.xlane.xlu0 %1147
  %v1149 = vsel %vm968, %v1114, 0.0
  %1150 = vadd.xlane.f32.xlu0 %v1149
  %v1151 = vpop.xlane.xlu0 %1150
  %v1152 = vsel %vm968, %v1116, 0.0
  %1153 = vadd.xlane.f32.xlu0 %v1152
  %v1154 = vpop.xlane.xlu0 %1153
  %v1155 = vsel %vm968, %v1118, 0.0
  %1156 = vadd.xlane.f32.xlu0 %v1155
  %v1157 = vpop.xlane.xlu0 %1156
  %v1158 = vsel %vm968, %v1120, 0.0
  %1159 = vadd.xlane.f32.xlu0 %v1158
  %v1160 = vpop.xlane.xlu0 %1159
  %v1161 = vadd.f32 %v1129, %v1139
  %v1162 = vadd.f32 %v1130, %v1142
  %v1163 = vadd.f32 %v1131, %v1145
  %v1164 = vadd.f32 %v1132, %v1148
  %v1165 = vadd.f32 %v1133, %v1151
  %v1166 = vadd.f32 %v1134, %v1154
  %v1167 = vadd.f32 %v1135, %v1157
  %v1168 = vadd.f32 %v1136, %v1160
  %vm1169 = vcmask 0
  %1170 = vst.msk [vmem:[#allocation3] sm:$0x1] %vm1169, %v1161
  %1171 = vst.msk [vmem:[#allocation3 + $0x1] sm:$0x1] %vm1169, %v1162
  %1172 = vst.msk [vmem:[#allocation3 + $0x2] sm:$0x1] %vm1169, %v1163
  %1173 = vst.msk [vmem:[#allocation3 + $0x3] sm:$0x1] %vm1169, %v1164
  %1174 = vst.msk [vmem:[#allocation3 + $0x4] sm:$0x1] %vm1169, %v1165
  %1175 = vst.msk [vmem:[#allocation3 + $0x5] sm:$0x1] %vm1169, %v1166
  %1176 = vst.msk [vmem:[#allocation3 + $0x6] sm:$0x1] %vm1169, %v1167
  %1177 = vst.msk [vmem:[#allocation3 + $0x7] sm:$0x1] %vm1169, %v1168
  %1178 = vst.msk [vmem:[#allocation2] sm:$0x1] %vm1169, %v993
  %1179 = vst.msk [vmem:[#allocation2 + $0x1] sm:$0x1] %vm1169, %v994
  %1180 = vst.msk [vmem:[#allocation2 + $0x2] sm:$0x1] %vm1169, %v995
  %1181 = vst.msk [vmem:[#allocation2 + $0x3] sm:$0x1] %vm1169, %v996
  %1182 = vst.msk [vmem:[#allocation2 + $0x4] sm:$0x1] %vm1169, %v997
  %1183 = vst.msk [vmem:[#allocation2 + $0x5] sm:$0x1] %vm1169, %v998
  %1184 = vst.msk [vmem:[#allocation2 + $0x6] sm:$0x1] %vm1169, %v999
  %1185 = vst.msk [vmem:[#allocation2 + $0x7] sm:$0x1] %vm1169, %v1000
  %v1186 = vpack.c.bf16 %v1106, %v1106
  %v1187 = vpack.c.bf16 %v1108, %v1108
  %v1188 = vpack.c.bf16 %v1110, %v1110
  %v1189 = vpack.c.bf16 %v1112, %v1112
  %v1190 = vpack.c.bf16 %v1114, %v1114
  %v1191 = vpack.c.bf16 %v1116, %v1116
  %v1192 = vpack.c.bf16 %v1118, %v1118
  %v1193 = vpack.c.bf16 %v1120, %v1120
  %vm1194 = vcmask 64512
  %v1196 = vsel %vm1194, %v1186, 0
  %vm1198 = vcmask 1043456
  %v1200 = vsel %vm1198, %v47, 0
  %1202 = vmatprep.subr.bf16.mxu0 0
  %1203 = vmatpush1.bf16.msra.mxu0 %v1200
  %1204 = vmatprep.subr.bf16.mxu0 0
  %1205 = vmatpush1.bf16.msra.mxu0 0
  %1206 = vmatprep.subr.bf16.mxu0 0
  %1207 = vmatpush1.bf16.msra.mxu0 0
  %1208 = vmatprep.subr.bf16.mxu0 0
  %1209 = vmatpush1.bf16.msra.mxu0 0
  %1210 = vmatprep.subr.bf16.mxu0 0
  %1211 = vmatpush1.bf16.msra.mxu0 0
  %1212 = vmatprep.subr.bf16.mxu0 0
  %1213 = vmatpush1.bf16.msra.mxu0 0
  %1214 = vmatprep.subr.bf16.mxu0 0
  %1215 = vmatpush1.bf16.msra.mxu0 0
  %1216 = vmatprep.subr.bf16.mxu0 0
  %1217 = vmatpush1.bf16.msra.mxu0 0
  %1218 = vmatprep.subr.bf16.mxu0 0
  %1219 = vmatpush1.bf16.msra.mxu0 0
  %1220 = vmatprep.subr.bf16.mxu0 0
  %1221 = vmatpush1.bf16.msra.mxu0 0
  %1222 = vmatprep.subr.bf16.mxu0 0
  %1223 = vmatpush1.bf16.msra.mxu0 0
  %1224 = vmatprep.subr.bf16.mxu0 0
  %1225 = vmatpush1.bf16.msra.mxu0 0
  %1226 = vmatprep.subr.bf16.mxu0 0
  %1227 = vmatpush1.bf16.msra.mxu0 0
  %1228 = vmatprep.subr.bf16.mxu0 0
  %1229 = vmatpush1.bf16.msra.mxu0 0
  %1230 = vmatprep.subr.bf16.mxu0 0
  %1231 = vmatpush1.bf16.msra.mxu0 0
  %1232 = vmatprep.subr.bf16.mxu0 0
  %1233 = vmatpush1.bf16.msra.mxu0 0
  %1234 = vmatprep.mubr.bf16.mxu0 0
  %1235 = vmatmul.mubr.bf16.gmra.mrb[0].mxu0 %v1196
  %v1236 = vpop.f32.mrb[0].mxu0
  %v1237 = vadd.f32 0.0, %v1236
  %v1238 = vpop.f32.mrb[0].mxu0
  %v1239 = vpop.f32.mrb[0].mxu0
  %v1240 = vpop.f32.mrb[0].mxu0
  %1241 = vdwg.mxu0
  %v1243 = vsel %vm1194, %v1187, 0
  %v1246 = vsel %vm1198, %v48, 0
  %1248 = vmatprep.subr.bf16.mxu0 0
  %1249 = vmatpush1.bf16.msra.mxu0 %v1246
  %1250 = vmatprep.subr.bf16.mxu0 0
  %1251 = vmatpush1.bf16.msra.mxu0 0
  %1252 = vmatprep.subr.bf16.mxu0 0
  %1253 = vmatpush1.bf16.msra.mxu0 0
  %1254 = vmatprep.subr.bf16.mxu0 0
  %1255 = vmatpush1.bf16.msra.mxu0 0
  %1256 = vmatprep.subr.bf16.mxu0 0
  %1257 = vmatpush1.bf16.msra.mxu0 0
  %1258 = vmatprep.subr.bf16.mxu0 0
  %1259 = vmatpush1.bf16.msra.mxu0 0
  %1260 = vmatprep.subr.bf16.mxu0 0
  %1261 = vmatpush1.bf16.msra.mxu0 0
  %1262 = vmatprep.subr.bf16.mxu0 0
  %1263 = vmatpush1.bf16.msra.mxu0 0
  %1264 = vmatprep.subr.bf16.mxu0 0
  %1265 = vmatpush1.bf16.msra.mxu0 0
  %1266 = vmatprep.subr.bf16.mxu0 0
  %1267 = vmatpush1.bf16.msra.mxu0 0
  %1268 = vmatprep.subr.bf16.mxu0 0
  %1269 = vmatpush1.bf16.msra.mxu0 0
  %1270 = vmatprep.subr.bf16.mxu0 0
  %1271 = vmatpush1.bf16.msra.mxu0 0
  %1272 = vmatprep.subr.bf16.mxu0 0
  %1273 = vmatpush1.bf16.msra.mxu0 0
  %1274 = vmatprep.subr.bf16.mxu0 0
  %1275 = vmatpush1.bf16.msra.mxu0 0
  %1276 = vmatprep.subr.bf16.mxu0 0
  %1277 = vmatpush1.bf16.msra.mxu0 0
  %1278 = vmatprep.subr.bf16.mxu0 0
  %1279 = vmatpush1.bf16.msra.mxu0 0
  %1280 = vmatprep.mubr.bf16.mxu0 0
  %1281 = vmatmul.mubr.bf16.gmra.mrb[0].mxu0 %v1243
  %v1282 = vpop.f32.mrb[0].mxu0
  %v1283 = vadd.f32 0.0, %v1282
  %v1284 = vpop.f32.mrb[0].mxu0
  %v1285 = vpop.f32.mrb[0].mxu0
  %v1286 = vpop.f32.mrb[0].mxu0
  %1287 = vdwg.mxu0
  %v1289 = vsel %vm1194, %v1188, 0
  %v1292 = vsel %vm1198, %v49, 0
  %1294 = vmatprep.subr.bf16.mxu0 0
  %1295 = vmatpush1.bf16.msra.mxu0 %v1292
  %1296 = vmatprep.subr.bf16.mxu0 0
  %1297 = vmatpush1.bf16.msra.mxu0 0
  %1298 = vmatprep.subr.bf16.mxu0 0
  %1299 = vmatpush1.bf16.msra.mxu0 0
  %1300 = vmatprep.subr.bf16.mxu0 0
  %1301 = vmatpush1.bf16.msra.mxu0 0
  %1302 = vmatprep.subr.bf16.mxu0 0
  %1303 = vmatpush1.bf16.msra.mxu0 0
  %1304 = vmatprep.subr.bf16.mxu0 0
  %1305 = vmatpush1.bf16.msra.mxu0 0
  %1306 = vmatprep.subr.bf16.mxu0 0
  %1307 = vmatpush1.bf16.msra.mxu0 0
  %1308 = vmatprep.subr.bf16.mxu0 0
  %1309 = vmatpush1.bf16.msra.mxu0 0
  %1310 = vmatprep.subr.bf16.mxu0 0
  %1311 = vmatpush1.bf16.msra.mxu0 0
  %1312 = vmatprep.subr.bf16.mxu0 0
  %1313 = vmatpush1.bf16.msra.mxu0 0
  %1314 = vmatprep.subr.bf16.mxu0 0
  %1315 = vmatpush1.bf16.msra.mxu0 0
  %1316 = vmatprep.subr.bf16.mxu0 0
  %1317 = vmatpush1.bf16.msra.mxu0 0
  %1318 = vmatprep.subr.bf16.mxu0 0
  %1319 = vmatpush1.bf16.msra.mxu0 0
  %1320 = vmatprep.subr.bf16.mxu0 0
  %1321 = vmatpush1.bf16.msra.mxu0 0
  %1322 = vmatprep.subr.bf16.mxu0 0
  %1323 = vmatpush1.bf16.msra.mxu0 0
  %1324 = vmatprep.subr.bf16.mxu0 0
  %1325 = vmatpush1.bf16.msra.mxu0 0
  %1326 = vmatprep.mubr.bf16.mxu0 0
  %1327 = vmatmul.mubr.bf16.gmra.mrb[0].mxu0 %v1289
  %v1328 = vpop.f32.mrb[0].mxu0
  %v1329 = vadd.f32 0.0, %v1328
  %v1330 = vpop.f32.mrb[0].mxu0
  %v1331 = vpop.f32.mrb[0].mxu0
  %v1332 = vpop.f32.mrb[0].mxu0
  %1333 = vdwg.mxu0
  %v1335 = vsel %vm1194, %v1189, 0
  %v1338 = vsel %vm1198, %v50, 0
  %1340 = vmatprep.subr.bf16.mxu0 0
  %1341 = vmatpush1.bf16.msra.mxu0 %v1338
  %1342 = vmatprep.subr.bf16.mxu0 0
  %1343 = vmatpush1.bf16.msra.mxu0 0
  %1344 = vmatprep.subr.bf16.mxu0 0
  %1345 = vmatpush1.bf16.msra.mxu0 0
  %1346 = vmatprep.subr.bf16.mxu0 0
  %1347 = vmatpush1.bf16.msra.mxu0 0
  %1348 = vmatprep.subr.bf16.mxu0 0
  %1349 = vmatpush1.bf16.msra.mxu0 0
  %1350 = vmatprep.subr.bf16.mxu0 0
  %1351 = vmatpush1.bf16.msra.mxu0 0
  %1352 = vmatprep.subr.bf16.mxu0 0
  %1353 = vmatpush1.bf16.msra.mxu0 0
  %1354 = vmatprep.subr.bf16.mxu0 0
  %1355 = vmatpush1.bf16.msra.mxu0 0
  %1356 = vmatprep.subr.bf16.mxu0 0
  %1357 = vmatpush1.bf16.msra.mxu0 0
  %1358 = vmatprep.subr.bf16.mxu0 0
  %1359 = vmatpush1.bf16.msra.mxu0 0
  %1360 = vmatprep.subr.bf16.mxu0 0
  %1361 = vmatpush1.bf16.msra.mxu0 0
  %1362 = vmatprep.subr.bf16.mxu0 0
  %1363 = vmatpush1.bf16.msra.mxu0 0
  %1364 = vmatprep.subr.bf16.mxu0 0
  %1365 = vmatpush1.bf16.msra.mxu0 0
  %1366 = vmatprep.subr.bf16.mxu0 0
  %1367 = vmatpush1.bf16.msra.mxu0 0
  %1368 = vmatprep.subr.bf16.mxu0 0
  %1369 = vmatpush1.bf16.msra.mxu0 0
  %1370 = vmatprep.subr.bf16.mxu0 0
  %1371 = vmatpush1.bf16.msra.mxu0 0
  %1372 = vmatprep.mubr.bf16.mxu0 0
  %1373 = vmatmul.mubr.bf16.gmra.mrb[0].mxu0 %v1335
  %v1374 = vpop.f32.mrb[0].mxu0
  %v1375 = vadd.f32 0.0, %v1374
  %v1376 = vpop.f32.mrb[0].mxu0
  %v1377 = vpop.f32.mrb[0].mxu0
  %v1378 = vpop.f32.mrb[0].mxu0
  %1379 = vdwg.mxu0
  %v1381 = vsel %vm1194, %v1190, 0
  %v1384 = vsel %vm1198, %v51, 0
  %1386 = vmatprep.subr.bf16.mxu0 0
  %1387 = vmatpush1.bf16.msra.mxu0 %v1384
  %1388 = vmatprep.subr.bf16.mxu0 0
  %1389 = vmatpush1.bf16.msra.mxu0 0
  %1390 = vmatprep.subr.bf16.mxu0 0
  %1391 = vmatpush1.bf16.msra.mxu0 0
  %1392 = vmatprep.subr.bf16.mxu0 0
  %1393 = vmatpush1.bf16.msra.mxu0 0
  %1394 = vmatprep.subr.bf16.mxu0 0
  %1395 = vmatpush1.bf16.msra.mxu0 0
  %1396 = vmatprep.subr.bf16.mxu0 0
  %1397 = vmatpush1.bf16.msra.mxu0 0
  %1398 = vmatprep.subr.bf16.mxu0 0
  %1399 = vmatpush1.bf16.msra.mxu0 0
  %1400 = vmatprep.subr.bf16.mxu0 0
  %1401 = vmatpush1.bf16.msra.mxu0 0
  %1402 = vmatprep.subr.bf16.mxu0 0
  %1403 = vmatpush1.bf16.msra.mxu0 0
  %1404 = vmatprep.subr.bf16.mxu0 0
  %1405 = vmatpush1.bf16.msra.mxu0 0
  %1406 = vmatprep.subr.bf16.mxu0 0
  %1407 = vmatpush1.bf16.msra.mxu0 0
  %1408 = vmatprep.subr.bf16.mxu0 0
  %1409 = vmatpush1.bf16.msra.mxu0 0
  %1410 = vmatprep.subr.bf16.mxu0 0
  %1411 = vmatpush1.bf16.msra.mxu0 0
  %1412 = vmatprep.subr.bf16.mxu0 0
  %1413 = vmatpush1.bf16.msra.mxu0 0
  %1414 = vmatprep.subr.bf16.mxu0 0
  %1415 = vmatpush1.bf16.msra.mxu0 0
  %1416 = vmatprep.subr.bf16.mxu0 0
  %1417 = vmatpush1.bf16.msra.mxu0 0
  %1418 = vmatprep.mubr.bf16.mxu0 0
  %1419 = vmatmul.mubr.bf16.gmra.mrb[0].mxu0 %v1381
  %v1420 = vpop.f32.mrb[0].mxu0
  %v1421 = vadd.f32 0.0, %v1420
  %v1422 = vpop.f32.mrb[0].mxu0
  %v1423 = vpop.f32.mrb[0].mxu0
  %v1424 = vpop.f32.mrb[0].mxu0
  %1425 = vdwg.mxu0
  %v1427 = vsel %vm1194, %v1191, 0
  %v1430 = vsel %vm1198, %v52, 0
  %1432 = vmatprep.subr.bf16.mxu0 0
  %1433 = vmatpush1.bf16.msra.mxu0 %v1430
  %1434 = vmatprep.subr.bf16.mxu0 0
  %1435 = vmatpush1.bf16.msra.mxu0 0
  %1436 = vmatprep.subr.bf16.mxu0 0
  %1437 = vmatpush1.bf16.msra.mxu0 0
  %1438 = vmatprep.subr.bf16.mxu0 0
  %1439 = vmatpush1.bf16.msra.mxu0 0
  %1440 = vmatprep.subr.bf16.mxu0 0
  %1441 = vmatpush1.bf16.msra.mxu0 0
  %1442 = vmatprep.subr.bf16.mxu0 0
  %1443 = vmatpush1.bf16.msra.mxu0 0
  %1444 = vmatprep.subr.bf16.mxu0 0
  %1445 = vmatpush1.bf16.msra.mxu0 0
  %1446 = vmatprep.subr.bf16.mxu0 0
  %1447 = vmatpush1.bf16.msra.mxu0 0
  %1448 = vmatprep.subr.bf16.mxu0 0
  %1449 = vmatpush1.bf16.msra.mxu0 0
  %1450 = vmatprep.subr.bf16.mxu0 0
  %1451 = vmatpush1.bf16.msra.mxu0 0
  %1452 = vmatprep.subr.bf16.mxu0 0
  %1453 = vmatpush1.bf16.msra.mxu0 0
  %1454 = vmatprep.subr.bf16.mxu0 0
  %1455 = vmatpush1.bf16.msra.mxu0 0
  %1456 = vmatprep.subr.bf16.mxu0 0
  %1457 = vmatpush1.bf16.msra.mxu0 0
  %1458 = vmatprep.subr.bf16.mxu0 0
  %1459 = vmatpush1.bf16.msra.mxu0 0
  %1460 = vmatprep.subr.bf16.mxu0 0
  %1461 = vmatpush1.bf16.msra.mxu0 0
  %1462 = vmatprep.subr.bf16.mxu0 0
  %1463 = vmatpush1.bf16.msra.mxu0 0
  %1464 = vmatprep.mubr.bf16.mxu0 0
  %1465 = vmatmul.mubr.bf16.gmra.mrb[0].mxu0 %v1427
  %v1466 = vpop.f32.mrb[0].mxu0
  %v1467 = vadd.f32 0.0, %v1466
  %v1468 = vpop.f32.mrb[0].mxu0
  %v1469 = vpop.f32.mrb[0].mxu0
  %v1470 = vpop.f32.mrb[0].mxu0
  %1471 = vdwg.mxu0
  %v1473 = vsel %vm1194, %v1192, 0
  %v1476 = vsel %vm1198, %v53, 0
  %1478 = vmatprep.subr.bf16.mxu0 0
  %1479 = vmatpush1.bf16.msra.mxu0 %v1476
  %1480 = vmatprep.subr.bf16.mxu0 0
  %1481 = vmatpush1.bf16.msra.mxu0 0
  %1482 = vmatprep.subr.bf16.mxu0 0
  %1483 = vmatpush1.bf16.msra.mxu0 0
  %1484 = vmatprep.subr.bf16.mxu0 0
  %1485 = vmatpush1.bf16.msra.mxu0 0
  %1486 = vmatprep.subr.bf16.mxu0 0
  %1487 = vmatpush1.bf16.msra.mxu0 0
  %1488 = vmatprep.subr.bf16.mxu0 0
  %1489 = vmatpush1.bf16.msra.mxu0 0
  %1490 = vmatprep.subr.bf16.mxu0 0
  %1491 = vmatpush1.bf16.msra.mxu0 0
  %1492 = vmatprep.subr.bf16.mxu0 0
  %1493 = vmatpush1.bf16.msra.mxu0 0
  %1494 = vmatprep.subr.bf16.mxu0 0
  %1495 = vmatpush1.bf16.msra.mxu0 0
  %1496 = vmatprep.subr.bf16.mxu0 0
  %1497 = vmatpush1.bf16.msra.mxu0 0
  %1498 = vmatprep.subr.bf16.mxu0 0
  %1499 = vmatpush1.bf16.msra.mxu0 0
  %1500 = vmatprep.subr.bf16.mxu0 0
  %1501 = vmatpush1.bf16.msra.mxu0 0
  %1502 = vmatprep.subr.bf16.mxu0 0
  %1503 = vmatpush1.bf16.msra.mxu0 0
  %1504 = vmatprep.subr.bf16.mxu0 0
  %1505 = vmatpush1.bf16.msra.mxu0 0
  %1506 = vmatprep.subr.bf16.mxu0 0
  %1507 = vmatpush1.bf16.msra.mxu0 0
  %1508 = vmatprep.subr.bf16.mxu0 0
  %1509 = vmatpush1.bf16.msra.mxu0 0
  %1510 = vmatprep.mubr.bf16.mxu0 0
  %1511 = vmatmul.mubr.bf16.gmra.mrb[0].mxu0 %v1473
  %v1512 = vpop.f32.mrb[0].mxu0
  %v1513 = vadd.f32 0.0, %v1512
  %v1514 = vpop.f32.mrb[0].mxu0
  %v1515 = vpop.f32.mrb[0].mxu0
  %v1516 = vpop.f32.mrb[0].mxu0
  %1517 = vdwg.mxu0
  %v1519 = vsel %vm1194, %v1193, 0
  %v1522 = vsel %vm1198, %v54, 0
  %1524 = vmatprep.subr.bf16.mxu0 0
  %1525 = vmatpush1.bf16.msra.mxu0 %v1522
  %1526 = vmatprep.subr.bf16.mxu0 0
  %1527 = vmatpush1.bf16.msra.mxu0 0
  %1528 = vmatprep.subr.bf16.mxu0 0
  %1529 = vmatpush1.bf16.msra.mxu0 0
  %1530 = vmatprep.subr.bf16.mxu0 0
  %1531 = vmatpush1.bf16.msra.mxu0 0
  %1532 = vmatprep.subr.bf16.mxu0 0
  %1533 = vmatpush1.bf16.msra.mxu0 0
  %1534 = vmatprep.subr.bf16.mxu0 0
  %1535 = vmatpush1.bf16.msra.mxu0 0
  %1536 = vmatprep.subr.bf16.mxu0 0
  %1537 = vmatpush1.bf16.msra.mxu0 0
  %1538 = vmatprep.subr.bf16.mxu0 0
  %1539 = vmatpush1.bf16.msra.mxu0 0
  %1540 = vmatprep.subr.bf16.mxu0 0
  %1541 = vmatpush1.bf16.msra.mxu0 0
  %1542 = vmatprep.subr.bf16.mxu0 0
  %1543 = vmatpush1.bf16.msra.mxu0 0
  %1544 = vmatprep.subr.bf16.mxu0 0
  %1545 = vmatpush1.bf16.msra.mxu0 0
  %1546 = vmatprep.subr.bf16.mxu0 0
  %1547 = vmatpush1.bf16.msra.mxu0 0
  %1548 = vmatprep.subr.bf16.mxu0 0
  %1549 = vmatpush1.bf16.msra.mxu0 0
  %1550 = vmatprep.subr.bf16.mxu0 0
  %1551 = vmatpush1.bf16.msra.mxu0 0
  %1552 = vmatprep.subr.bf16.mxu0 0
  %1553 = vmatpush1.bf16.msra.mxu0 0
  %1554 = vmatprep.subr.bf16.mxu0 0
  %1555 = vmatpush1.bf16.msra.mxu0 0
  %1556 = vmatprep.mubr.bf16.mxu0 0
  %1557 = vmatmul.mubr.bf16.gmra.mrb[0].mxu0 %v1519
  %v1558 = vpop.f32.mrb[0].mxu0
  %v1559 = vadd.f32 0.0, %v1558
  %v1560 = vpop.f32.mrb[0].mxu0
  %v1561 = vpop.f32.mrb[0].mxu0
  %v1562 = vpop.f32.mrb[0].mxu0
  %1563 = vdwg.mxu0
  %v1564 = vld [vmem:[#allocation4] sm:$0x1]
  %v1565 = vld [vmem:[#allocation4 + $0x1] sm:$0x1]
  %v1566 = vld [vmem:[#allocation4 + $0x2] sm:$0x1]
  %v1567 = vld [vmem:[#allocation4 + $0x3] sm:$0x1]
  %v1568 = vld [vmem:[#allocation4 + $0x4] sm:$0x1]
  %v1569 = vld [vmem:[#allocation4 + $0x5] sm:$0x1]
  %v1570 = vld [vmem:[#allocation4 + $0x6] sm:$0x1]
  %v1571 = vld [vmem:[#allocation4 + $0x7] sm:$0x1]
  %1573 = vset.pattern.permute.xlu0 0
  %1574 = vperm.xlu0 %1573, %v1010
  %v1575 = vpop.permute.xlu0 %1574
  %v1577 = vlaneseq
  %v1578 = vshrl.u32 %v1577, 7
  %v1579 = vsub.s32 0, %v1578
  %v1580 = vrot.slane %v1575, %v1579
  %1582 = vset.pattern.permute.xlu0 0
  %1583 = vperm.xlu0 %1582, %v1012
  %v1584 = vpop.permute.xlu0 %1583
  %v1586 = vlaneseq
  %v1587 = vshrl.u32 %v1586, 7
  %v1588 = vsub.s32 0, %v1587
  %v1589 = vrot.slane %v1584, %v1588
  %1591 = vset.pattern.permute.xlu0 0
  %1592 = vperm.xlu0 %1591, %v1014
  %v1593 = vpop.permute.xlu0 %1592
  %v1595 = vlaneseq
  %v1596 = vshrl.u32 %v1595, 7
  %v1597 = vsub.s32 0, %v1596
  %v1598 = vrot.slane %v1593, %v1597
  %1600 = vset.pattern.permute.xlu0 0
  %1601 = vperm.xlu0 %1600, %v1016
  %v1602 = vpop.permute.xlu0 %1601
  %v1604 = vlaneseq
  %v1605 = vshrl.u32 %v1604, 7
  %v1606 = vsub.s32 0, %v1605
  %v1607 = vrot.slane %v1602, %v1606
  %1609 = vset.pattern.permute.xlu0 0
  %1610 = vperm.xlu0 %1609, %v1018
  %v1611 = vpop.permute.xlu0 %1610
  %v1613 = vlaneseq
  %v1614 = vshrl.u32 %v1613, 7
  %v1615 = vsub.s32 0, %v1614
  %v1616 = vrot.slane %v1611, %v1615
  %1618 = vset.pattern.permute.xlu0 0
  %1619 = vperm.xlu0 %1618, %v1020
  %v1620 = vpop.permute.xlu0 %1619
  %v1622 = vlaneseq
  %v1623 = vshrl.u32 %v1622, 7
  %v1624 = vsub.s32 0, %v1623
  %v1625 = vrot.slane %v1620, %v1624
  %1627 = vset.pattern.permute.xlu0 0
  %1628 = vperm.xlu0 %1627, %v1022
  %v1629 = vpop.permute.xlu0 %1628
  %v1631 = vlaneseq
  %v1632 = vshrl.u32 %v1631, 7
  %v1633 = vsub.s32 0, %v1632
  %v1634 = vrot.slane %v1629, %v1633
  %1636 = vset.pattern.permute.xlu0 0
  %1637 = vperm.xlu0 %1636, %v1024
  %v1638 = vpop.permute.xlu0 %1637
  %v1640 = vlaneseq
  %v1641 = vshrl.u32 %v1640, 7
  %v1642 = vsub.s32 0, %v1641
  %v1643 = vrot.slane %v1638, %v1642
  %v1644 = vmul.f32 %v1580, %v1564
  %v1645 = vmul.f32 %v1589, %v1565
  %v1646 = vmul.f32 %v1598, %v1566
  %v1647 = vmul.f32 %v1607, %v1567
  %v1648 = vmul.f32 %v1616, %v1568
  %v1649 = vmul.f32 %v1625, %v1569
  %v1650 = vmul.f32 %v1634, %v1570
  %v1651 = vmul.f32 %v1643, %v1571
  %v1652 = vadd.f32 %v1644, %v1237
  %v1653 = vadd.f32 %v1645, %v1283
  %v1654 = vadd.f32 %v1646, %v1329
  %v1655 = vadd.f32 %v1647, %v1375
  %v1656 = vadd.f32 %v1648, %v1421
  %v1657 = vadd.f32 %v1649, %v1467
  %v1658 = vadd.f32 %v1650, %v1513
  %v1659 = vadd.f32 %v1651, %v1559
  %1660 = vst [vmem:[#allocation4] sm:$0x1] %v1652
  %1661 = vst [vmem:[#allocation4 + $0x1] sm:$0x1] %v1653
  %1662 = vst [vmem:[#allocation4 + $0x2] sm:$0x1] %v1654
  %1663 = vst [vmem:[#allocation4 + $0x3] sm:$0x1] %v1655
  %1664 = vst [vmem:[#allocation4 + $0x4] sm:$0x1] %v1656
  %1665 = vst [vmem:[#allocation4 + $0x5] sm:$0x1] %v1657
  %1666 = vst [vmem:[#allocation4 + $0x6] sm:$0x1] %v1658
  %1667 = vst [vmem:[#allocation4 + $0x7] sm:$0x1] %v1659
  // Predicated region
  $region22: #{attention_pooling.1} parent=0 // pred_check
    %p1668 = pneg %p18
  $region23: #{attention_pooling.1} parent=0 // pred_check_branch
    %1670 = sbr.rel (%p1668) target = $region25
  $region24: #{attention_pooling.1} parent=0 // pred_region
    %v1671 = vld [vmem:[#allocation4] sm:$0x1]
    %v1672 = vld [vmem:[#allocation4 + $0x1] sm:$0x1]
    %v1673 = vld [vmem:[#allocation4 + $0x2] sm:$0x1]
    %v1674 = vld [vmem:[#allocation4 + $0x3] sm:$0x1]
    %v1675 = vld [vmem:[#allocation4 + $0x4] sm:$0x1]
    %v1676 = vld [vmem:[#allocation4 + $0x5] sm:$0x1]
    %v1677 = vld [vmem:[#allocation4 + $0x6] sm:$0x1]
    %v1678 = vld [vmem:[#allocation4 + $0x7] sm:$0x1]
    %v1679 = vld [vmem:[#allocation3] sm:$0x1]
    %v1680 = vld [vmem:[#allocation3 + $0x1] sm:$0x1]
    %v1681 = vld [vmem:[#allocation3 + $0x2] sm:$0x1]
    %v1682 = vld [vmem:[#allocation3 + $0x3] sm:$0x1]
    %v1683 = vld [vmem:[#allocation3 + $0x4] sm:$0x1]
    %v1684 = vld [vmem:[#allocation3 + $0x5] sm:$0x1]
    %v1685 = vld [vmem:[#allocation3 + $0x6] sm:$0x1]
    %v1686 = vld [vmem:[#allocation3 + $0x7] sm:$0x1]
    %v1687 = vrcp.pop %v1679
    %v1688 = vrcp.pop %v1680
    %v1689 = vrcp.pop %v1681
    %v1690 = vrcp.pop %v1682
    %v1691 = vrcp.pop %v1683
    %v1692 = vrcp.pop %v1684
    %v1693 = vrcp.pop %v1685
    %v1694 = vrcp.pop %v1686
    %1696 = vset.pattern.permute.xlu0 0
    %1697 = vperm.xlu0 %1696, %v1687
    %v1698 = vpop.permute.xlu0 %1697
    %v1700 = vlaneseq
    %v1701 = vshrl.u32 %v1700, 7
    %v1702 = vsub.s32 0, %v1701
    %v1703 = vrot.slane %v1698, %v1702
    %1705 = vset.pattern.permute.xlu0 0
    %1706 = vperm.xlu0 %1705, %v1688
    %v1707 = vpop.permute.xlu0 %1706
    %v1709 = vlaneseq
    %v1710 = vshrl.u32 %v1709, 7
    %v1711 = vsub.s32 0, %v1710
    %v1712 = vrot.slane %v1707, %v1711
    %1714 = vset.pattern.permute.xlu0 0
    %1715 = vperm.xlu0 %1714, %v1689
    %v1716 = vpop.permute.xlu0 %1715
    %v1718 = vlaneseq
    %v1719 = vshrl.u32 %v1718, 7
    %v1720 = vsub.s32 0, %v1719
    %v1721 = vrot.slane %v1716, %v1720
    %1723 = vset.pattern.permute.xlu0 0
    %1724 = vperm.xlu0 %1723, %v1690
    %v1725 = vpop.permute.xlu0 %1724
    %v1727 = vlaneseq
    %v1728 = vshrl.u32 %v1727, 7
    %v1729 = vsub.s32 0, %v1728
    %v1730 = vrot.slane %v1725, %v1729
    %1732 = vset.pattern.permute.xlu0 0
    %1733 = vperm.xlu0 %1732, %v1691
    %v1734 = vpop.permute.xlu0 %1733
    %v1736 = vlaneseq
    %v1737 = vshrl.u32 %v1736, 7
    %v1738 = vsub.s32 0, %v1737
    %v1739 = vrot.slane %v1734, %v1738
    %1741 = vset.pattern.permute.xlu0 0
    %1742 = vperm.xlu0 %1741, %v1692
    %v1743 = vpop.permute.xlu0 %1742
    %v1745 = vlaneseq
    %v1746 = vshrl.u32 %v1745, 7
    %v1747 = vsub.s32 0, %v1746
    %v1748 = vrot.slane %v1743, %v1747
    %1750 = vset.pattern.permute.xlu0 0
    %1751 = vperm.xlu0 %1750, %v1693
    %v1752 = vpop.permute.xlu0 %1751
    %v1754 = vlaneseq
    %v1755 = vshrl.u32 %v1754, 7
    %v1756 = vsub.s32 0, %v1755
    %v1757 = vrot.slane %v1752, %v1756
    %1759 = vset.pattern.permute.xlu0 0
    %1760 = vperm.xlu0 %1759, %v1694
    %v1761 = vpop.permute.xlu0 %1760
    %v1763 = vlaneseq
    %v1764 = vshrl.u32 %v1763, 7
    %v1765 = vsub.s32 0, %v1764
    %v1766 = vrot.slane %v1761, %v1765
    %v1767 = vmul.f32 %v1671, %v1703
    %v1768 = vmul.f32 %v1672, %v1712
    %v1769 = vmul.f32 %v1673, %v1721
    %v1770 = vmul.f32 %v1674, %v1730
    %v1771 = vmul.f32 %v1675, %v1739
    %v1772 = vmul.f32 %v1676, %v1748
    %v1773 = vmul.f32 %v1677, %v1757
    %v1774 = vmul.f32 %v1678, %v1766
    %1775 = vst [vmem:[%s4] sm:$0x1] %v1767
    %1776 = vst [vmem:[%s4 + $0x1] sm:$0x1] %v1768
    %1777 = vst [vmem:[%s4 + $0x2] sm:$0x1] %v1769
    %1778 = vst [vmem:[%s4 + $0x3] sm:$0x1] %v1770
    %1779 = vst [vmem:[%s4 + $0x4] sm:$0x1] %v1771
    %1780 = vst [vmem:[%s4 + $0x5] sm:$0x1] %v1772
    %1781 = vst [vmem:[%s4 + $0x6] sm:$0x1] %v1773
    %1782 = vst [vmem:[%s4 + $0x7] sm:$0x1] %v1774
  $region25: #{attention_pooling.1} parent=0 // pred_fallthru
    _
  // Predicated region
  $region26: #{attention_pooling.1} parent=0 // pred_check
    _
  $region27: #{attention_pooling.1} parent=0 // pred_check_branch
    %1784 = sbr.rel (0) target = $region29
  $region28: #{attention_pooling.1} parent=0 // pred_region
    _
  $region29: #{attention_pooling.1} parent=0 // pred_fallthru
    _
  // Predicated region
  $region30: #{attention_pooling.1} parent=0 // pred_check
    _
  $region31: #{attention_pooling.1} parent=0 // pred_check_branch
    %1786 = sbr.rel (0) target = $region33
  $region32: #{attention_pooling.1} parent=0 // pred_region
    _
  $region33: #{attention_pooling.1} parent=0 // pred_fallthru
    _

</llo_original>
